<compile_context>
chip_gen: v7x
topology: tpu7x:2x2x1
jax: 0.10.0
libtpu: 0.0.40
codegen_flags: <defaults>
</compile_context>

<pallas_src>
import jax
import jax.numpy as jnp
from jax import lax
from jax.experimental import pallas as pl
from jax.experimental.pallas import tpu as pltpu


def _round_up(x, m):
    return (x + m - 1) // m * m


# ---------------------------------------------------------------------------
# Fused kernel body builder
# ---------------------------------------------------------------------------
def _build_kernel(n_layers, tile_t, seq_len, relu_flags, compute_dtype):
    n_halo = n_layers                      # one extra halo row per fused conv layer
    slab_rows = tile_t + 2 * n_halo

    def kernel(x_hbm, *refs):
        # --- unpack refs: inputs, output, scratch ---
        w_refs = [refs[2 * l] for l in range(n_layers)]        # (3, Cin, Cout) taps
        c_refs = [refs[2 * l + 1] for l in range(n_layers)]    # (3, Cout) [bias, scale, shift]
        base = 2 * n_layers
        wlin_ref = refs[base]                                   # (C_last, 128)  BN-folded linear
        blin_ref = refs[base + 1]                               # (1, 128)       BN-folded bias
        out_ref = refs[base + 2]                                # (tile_t, 128)
        xbuf = refs[base + 3]                                   # (2, slab_rows, C0) double buffer
        ybufs = list(refs[base + 4: base + 4 + n_layers - 1])   # inter-layer activations (VMEM)
        sem = refs[base + 4 + n_layers - 1]                     # DMA sems (2,)

        b = pl.program_id(0)
        t = pl.program_id(1)
        n_t = pl.num_programs(1)
        slot = t & 1

        def input_copy(bb, tt, sl):
            row0 = pl.multiple_of(tt * tile_t, tile_t)
            return pltpu.make_async_copy(
                x_hbm.at[bb, pl.ds(row0, slab_rows), :],
                xbuf.at[sl],
                sem.at[sl])

        @pl.when(t == 0)                    # warm-up fetch for this batch row
        def _():
            input_copy(b, t, slot).start()

        @pl.when(t + 1 < n_t)               # prefetch next time-tile into the other slot
        def _():
            input_copy(b, t + 1, 1 - slot).start()

        input_copy(b, t, slot).wait()       # current tile's padded slab is ready

        src = xbuf.at[slot]
        for l in range(n_layers):
            rows = tile_t + 2 * (n_layers - 1 - l)
            w = w_refs[l]
            # k=3 "same" conv as three MXU matmuls on sublane-shifted REF slices,
            # accumulated in f32 (no operand upcasts, no shifted-copy materialization).
            acc = jnp.dot(src[pl.ds(0, rows), :], w[0],
                          preferred_element_type=jnp.float32)
            acc = acc + jnp.dot(src[pl.ds(1, rows), :], w[1],
                                preferred_element_type=jnp.float32)
            acc = acc + jnp.dot(src[pl.ds(2, rows), :], w[2],
                                preferred_element_type=jnp.float32)
            consts = c_refs[l][...]          # (3, Cout) f32
            acc = acc + consts[0:1, :]       # conv bias
            if relu_flags[l]:
                acc = jnp.maximum(acc, 0.0)

            if l < n_layers - 1:
                y = acc * consts[1:2, :] + consts[2:3, :]       # eval-mode BatchNorm
                # Zero rows outside [0, seq_len): reproduces the NEXT layer's own
                # zero padding exactly in the fused valid-conv scheme.
                g0 = t * tile_t + (l + 1) - n_halo               # global pos of row 0
                gid = g0 + lax.broadcasted_iota(jnp.int32, (rows, 1), 0)
                y = jnp.where((gid >= 0) & (gid < seq_len), y, 0.0)
                ybufs[l][...] = y.astype(compute_dtype)
                src = ybufs[l]
            else:
                # Last conv layer: BatchNorm folded into the linear weights on host,
                # so the epilogue is ReLU(conv + bias) @ W' + b'.
                y = jnp.dot(acc.astype(compute_dtype), wlin_ref[...],
                            preferred_element_type=jnp.float32)
                out_ref[...] = (y + blin_ref[...]).astype(out_ref.dtype)

    return kernel


# ---------------------------------------------------------------------------
# Wrapper
# ---------------------------------------------------------------------------
def conv1d_projection(x, layer_params, w_lin, *, tile_t=256,
                      compute_dtype=jnp.bfloat16, vmem_limit_bytes=None):
    """Fused Pallas forward of Conv1DProjection.

    x           : (B, T, K*128)  channel-last activations
    layer_params: list of (w3, bias, scale, shift, relu) per Conv1DBN layer, where
                  w3 = pytorch Conv1d weight.transpose(2, 1, 0) -> (3, Cin, Cout),
                  scale = gamma / sqrt(running_var + eps), shift = beta - mean*scale
    w_lin       : (hidden_dims[-1], 128) = pytorch Linear weight.T (bias-free)
    """
    B, T, C0 = x.shape
    n_layers = len(layer_params)
    assert n_layers >= 1, "need at least one Conv1DBN layer"
    n_halo = n_layers
    tile_t = max(8, min(tile_t, _round_up(T, 8)))
    assert tile_t % 8 == 0
    n_t = -(-T // tile_t)
    t_pad = n_t * tile_t
    cdt = jnp.dtype(compute_dtype)

    # One zero-pad for the whole stack (k=3 halo of every fused conv layer) plus
    # rounding T up to a multiple of tile_t; cast to the MXU operand dtype here too.
    x_pad = jnp.pad(x.astype(cdt), ((0, 0), (n_halo, n_halo + t_pad - T), (0, 0)))

    args = [x_pad]
    in_specs = [pl.BlockSpec(memory_space=pl.ANY)]   # HBM-resident; halo slab DMA'd manually
    relu_flags = []
    dims = []
    for (w3, bias, scale, shift, relu) in layer_params:
        _, cin, cout = w3.shape
        dims.append((cin, cout))
        relu_flags.append(bool(relu))
        args.append(w3.astype(cdt))                                     # conv taps (resident)
        in_specs.append(pl.BlockSpec((3, cin, cout), lambda b, t: (0, 0, 0)))
        args.append(jnp.stack([bias, scale, shift]).astype(jnp.float32))  # packed constants
        in_specs.append(pl.BlockSpec((3, cout), lambda b, t: (0, 0)))

    c_last = dims[-1][1]
    d_out = w_lin.shape[1]
    scale_last, shift_last = layer_params[-1][2], layer_params[-1][3]
    args.append((scale_last[:, None] * w_lin).astype(cdt))              # BN scale folded
    in_specs.append(pl.BlockSpec((c_last, d_out), lambda b, t: (0, 0)))
    args.append((shift_last @ w_lin).reshape(1, d_out).astype(jnp.float32))  # BN shift folded
    in_specs.append(pl.BlockSpec((1, d_out), lambda b, t: (0, 0)))

    scratch_shapes = (
        [pltpu.VMEM((2, tile_t + 2 * n_halo, C0), cdt)]                     # double-buffered slab
        + [pltpu.VMEM((tile_t + 2 * (n_layers - 1 - l), dims[l][1]), cdt)   # inter-layer acts
           for l in range(n_layers - 1)]
        + [pltpu.SemaphoreType.DMA((2,))])

    flops = 2 * B * t_pad * (sum(3 * ci * co for ci, co in dims) + c_last * d_out)
    bytes_accessed = (x_pad.size * x_pad.dtype.itemsize
                      + B * t_pad * d_out * jnp.dtype(x.dtype).itemsize
                      + sum(a.size * a.dtype.itemsize for a in args[1:]))

    cp_kwargs = dict(dimension_semantics=("parallel", "arbitrary"))
    if vmem_limit_bytes is not None:   # raise on v5e (16 MiB default scoped) for big tiles
        cp_kwargs["vmem_limit_bytes"] = vmem_limit_bytes

    out = pl.pallas_call(
        _build_kernel(n_layers, tile_t, T, tuple(relu_flags), cdt),
        out_shape=jax.ShapeDtypeStruct((B, t_pad, d_out), x.dtype),
        grid_spec=pltpu.PrefetchScalarGridSpec(
            num_scalar_prefetch=0,
            grid=(B, n_t),
            in_specs=in_specs,
            out_specs=pl.BlockSpec((None, tile_t, d_out), lambda b, t: (b, t, 0)),
            scratch_shapes=scratch_shapes),
        compiler_params=pltpu.CompilerParams(**cp_kwargs),
        cost_estimate=pl.CostEstimate(flops=int(flops), transcendentals=0,
                                      bytes_accessed=int(bytes_accessed)),
    )(*args)
    return out if t_pad == T else out[:, :T, :]


# ---------------------------------------------------------------------------
# Pure-JAX reference (independent of the kernel internals)
# ---------------------------------------------------------------------------
def conv1d_projection_ref(x, layer_params, w_lin):
    y = x
    for (w3, b, sc, sh, relu) in layer_params:
        y = lax.conv_general_dilated(
            y, w3, window_strides=(1,), padding=[(1, 1)],
            dimension_numbers=("NWC", "WIO", "NWC"),
            precision=lax.Precision.HIGHEST) + b
        if relu:
            y = jnp.maximum(y, 0.0)
        y = y * sc + sh
    return jnp.dot(y, w_lin, precision=lax.Precision.HIGHEST)


if __name__ == "__main__":
    key = jax.random.PRNGKey(0)

    # Small but module-consistent shapes: K=1 conv bank -> C0 = K*128 = 128.
    B, T, K = 2, 16, 1
    hidden_dims = [256, 256, 128]    # conv layers: 128->256, 256->128; linear 128->128
    eps = 1e-5

    # Mirror Conv1DProjection.__init__ exactly (including the zip truncation,
    # which gives every instantiated Conv1DBN layer a ReLU).
    in_dims = [K * 128] + hidden_dims[:-1]
    out_dims = hidden_dims[1:]
    activations = ["relu"] * len(out_dims) + [None]
    layer_cfg = list(zip(in_dims, out_dims, activations))

    layer_params = []
    for li, (cin, cout, act) in enumerate(layer_cfg):
        kw, kb, kg, kbeta, km, kv = jax.random.split(jax.random.fold_in(key, li), 6)
        bound = 1.0 / (3 * cin) ** 0.5                 # PyTorch Conv1d init bound
        w3 = jax.random.uniform(kw, (3, cin, cout), jnp.float32, -bound, bound)
        b = jax.random.uniform(kb, (cout,), jnp.float32, -bound, bound)
        gamma = jax.random.uniform(kg, (cout,), jnp.float32, 0.5, 1.5)
        beta = 0.1 * jax.random.normal(kbeta, (cout,), jnp.float32)
        mean = 0.1 * jax.random.normal(km, (cout,), jnp.float32)
        var = jax.random.uniform(kv, (cout,), jnp.float32, 0.5, 1.5)
        scale = gamma * lax.rsqrt(var + eps)           # eval-mode BN folded
        shift = beta - mean * scale
        layer_params.append((w3, b, scale, shift, act == "relu"))

    kx, kl = jax.random.split(jax.random.fold_in(key, 1000), 2)
    d_last = hidden_dims[-1]
    lb = 1.0 / d_last ** 0.5
    w_lin = jax.random.uniform(kl, (d_last, 128), jnp.float32, -lb, lb)
    x = jax.random.normal(kx, (B, T, K * 128), jnp.float32)

    ref = conv1d_projection_ref(x, layer_params, w_lin)

    # f32 MXU operands (tight tolerance); tile_t=8 -> 2 time tiles per batch row,
    # exercising the halo, boundary masking and the double-buffered prefetch chain.
    out_f32 = conv1d_projection(x, layer_params, w_lin, tile_t=8,
                                compute_dtype=jnp.float32)
    out_f32 = jax.block_until_ready(out_f32)
    assert out_f32.shape == (B, T, 128)
    err32 = float(jnp.max(jnp.abs(out_f32 - ref)))
    assert jnp.allclose(out_f32, ref, atol=2e-3, rtol=2e-3), (
        f"f32 mismatch vs reference, max abs err = {err32}")

    # bf16 MXU operands (recommended config on v6e/v7x); looser tolerance.
    out_bf16 = conv1d_projection(x, layer_params, w_lin, tile_t=8,
                                 compute_dtype=jnp.bfloat16)
    out_bf16 = jax.block_until_ready(out_bf16)
    assert out_bf16.shape == (B, T, 128)
    err16 = float(jnp.max(jnp.abs(out_bf16 - ref)))
    assert jnp.allclose(out_bf16, ref, atol=1e-1, rtol=1e-1), (
        f"bf16 mismatch vs reference, max abs err = {err16}")

    print("KERNEL_OK")
</pallas_src>

<mosaic_0001>
module attributes {stable_mosaic.version = 11 : i64} {
  func.func @kernel(%arg0: i32, %arg1: i32, %arg2: memref<2x20x128xf32, #tpu.memory_space<any>>, %arg3: memref<3x128x256xf32, #tpu.memory_space<vmem>>, %arg4: memref<3x256xf32, #tpu.memory_space<vmem>>, %arg5: memref<3x256x128xf32, #tpu.memory_space<vmem>>, %arg6: memref<3x128xf32, #tpu.memory_space<vmem>>, %arg7: memref<128x128xf32, #tpu.memory_space<vmem>>, %arg8: memref<1x128xf32, #tpu.memory_space<vmem>>, %arg9: memref<1x8x128xf32, #tpu.memory_space<vmem>>, %arg10: memref<2x12x128xf32, #tpu.memory_space<vmem>>, %arg11: memref<10x256xf32, #tpu.memory_space<vmem>>, %arg12: memref<2x!tpu.dma_semaphore, #tpu.memory_space<semaphore_mem>>) attributes {dimension_semantics = [#tpu.dimension_semantics<parallel>, #tpu.dimension_semantics<arbitrary>], iteration_bounds = array<i64: 2, 2>, scalar_prefetch = 0 : i64, scratch_operands = 3 : i64, tpu.core_type = #tpu.core_type<tc>, window_params = [{}, {pipeline_mode = #tpu.pipeline_mode<synchronous>, transform_indices = @transform_1, window_bounds = array<i64: 3, 128, 256>}, {pipeline_mode = #tpu.pipeline_mode<synchronous>, transform_indices = @transform_2, window_bounds = array<i64: 3, 256>}, {pipeline_mode = #tpu.pipeline_mode<synchronous>, transform_indices = @transform_3, window_bounds = array<i64: 3, 256, 128>}, {pipeline_mode = #tpu.pipeline_mode<synchronous>, transform_indices = @transform_4, window_bounds = array<i64: 3, 128>}, {pipeline_mode = #tpu.pipeline_mode<synchronous>, transform_indices = @transform_5, window_bounds = array<i64: 128, 128>}, {pipeline_mode = #tpu.pipeline_mode<synchronous>, transform_indices = @transform_6, window_bounds = array<i64: 1, 128>}, {transform_indices = @transform_7, window_bounds = array<i64: 1, 8, 128>}]} {
    %c1_i32 = arith.constant 1 : i32
    %0 = arith.andi %arg1, %c1_i32 : i32
    %c0_i32 = arith.constant 0 : i32
    %1 = arith.cmpi eq, %arg1, %c0_i32 : i32
    %2 = arith.extui %1 : i1 to i32
    %c0_i32_0 = arith.constant 0 : i32
    %3 = arith.cmpi ne, %2, %c0_i32_0 : i32
    scf.if %3 {
      %c8_i32_65 = arith.constant 8 : i32
      %92 = arith.muli %arg1, %c8_i32_65 : i32
      %93 = tpu.assume_multiple %92, 8 : i32
      %c0_i32_66 = arith.constant 0 : i32
      %94 = tpu.memref_slice %arg2[%arg0, %93, %c0_i32_66] : memref<2x20x128xf32, #tpu.memory_space<any>> -> memref<1x12x128xf32, #tpu.memory_space<any>>
      %95 = tpu.memref_squeeze %94 : memref<1x12x128xf32, #tpu.memory_space<any>> -> memref<12x128xf32, #tpu.memory_space<any>>
      %c0_i32_67 = arith.constant 0 : i32
      %c0_i32_68 = arith.constant 0 : i32
      %96 = tpu.memref_slice %arg10[%0, %c0_i32_67, %c0_i32_68] : memref<2x12x128xf32, #tpu.memory_space<vmem>> -> memref<1x12x128xf32, #tpu.memory_space<vmem>>
      %97 = tpu.memref_squeeze %96 : memref<1x12x128xf32, #tpu.memory_space<vmem>> -> memref<12x128xf32, #tpu.memory_space<vmem>>
      %98 = tpu.memref_slice %arg12[%0] : memref<2x!tpu.dma_semaphore, #tpu.memory_space<semaphore_mem>> -> memref<1x!tpu.dma_semaphore, #tpu.memory_space<semaphore_mem>>
      %99 = tpu.memref_squeeze %98 : memref<1x!tpu.dma_semaphore, #tpu.memory_space<semaphore_mem>> -> memref<!tpu.dma_semaphore, #tpu.memory_space<semaphore_mem>>
      tpu.enqueue_dma source(%95 : memref<12x128xf32, #tpu.memory_space<any>>) target(%97 : memref<12x128xf32, #tpu.memory_space<vmem>>) target_semaphore(%99 : memref<!tpu.dma_semaphore, #tpu.memory_space<semaphore_mem>>)
    } else {
    }
    %c1_i32_1 = arith.constant 1 : i32
    %4 = arith.addi %arg1, %c1_i32_1 : i32
    %c2_i32 = arith.constant 2 : i32
    %5 = arith.cmpi slt, %4, %c2_i32 : i32
    %6 = arith.extui %5 : i1 to i32
    %c0_i32_2 = arith.constant 0 : i32
    %7 = arith.cmpi ne, %6, %c0_i32_2 : i32
    scf.if %7 {
      %c1_i32_65 = arith.constant 1 : i32
      %92 = arith.addi %arg1, %c1_i32_65 : i32
      %c1_i32_66 = arith.constant 1 : i32
      %93 = arith.subi %c1_i32_66, %0 : i32
      %c8_i32_67 = arith.constant 8 : i32
      %94 = arith.muli %92, %c8_i32_67 : i32
      %95 = tpu.assume_multiple %94, 8 : i32
      %c0_i32_68 = arith.constant 0 : i32
      %96 = tpu.memref_slice %arg2[%arg0, %95, %c0_i32_68] : memref<2x20x128xf32, #tpu.memory_space<any>> -> memref<1x12x128xf32, #tpu.memory_space<any>>
      %97 = tpu.memref_squeeze %96 : memref<1x12x128xf32, #tpu.memory_space<any>> -> memref<12x128xf32, #tpu.memory_space<any>>
      %c0_i32_69 = arith.constant 0 : i32
      %c0_i32_70 = arith.constant 0 : i32
      %98 = tpu.memref_slice %arg10[%93, %c0_i32_69, %c0_i32_70] : memref<2x12x128xf32, #tpu.memory_space<vmem>> -> memref<1x12x128xf32, #tpu.memory_space<vmem>>
      %99 = tpu.memref_squeeze %98 : memref<1x12x128xf32, #tpu.memory_space<vmem>> -> memref<12x128xf32, #tpu.memory_space<vmem>>
      %100 = tpu.memref_slice %arg12[%93] : memref<2x!tpu.dma_semaphore, #tpu.memory_space<semaphore_mem>> -> memref<1x!tpu.dma_semaphore, #tpu.memory_space<semaphore_mem>>
      %101 = tpu.memref_squeeze %100 : memref<1x!tpu.dma_semaphore, #tpu.memory_space<semaphore_mem>> -> memref<!tpu.dma_semaphore, #tpu.memory_space<semaphore_mem>>
      tpu.enqueue_dma source(%97 : memref<12x128xf32, #tpu.memory_space<any>>) target(%99 : memref<12x128xf32, #tpu.memory_space<vmem>>) target_semaphore(%101 : memref<!tpu.dma_semaphore, #tpu.memory_space<semaphore_mem>>)
    } else {
    }
    %c8_i32 = arith.constant 8 : i32
    %8 = arith.muli %arg1, %c8_i32 : i32
    %9 = tpu.assume_multiple %8, 8 : i32
    %c0_i32_3 = arith.constant 0 : i32
    %10 = tpu.memref_slice %arg2[%arg0, %9, %c0_i32_3] : memref<2x20x128xf32, #tpu.memory_space<any>> -> memref<1x12x128xf32, #tpu.memory_space<any>>
    %11 = tpu.memref_squeeze %10 : memref<1x12x128xf32, #tpu.memory_space<any>> -> memref<12x128xf32, #tpu.memory_space<any>>
    %c0_i32_4 = arith.constant 0 : i32
    %c0_i32_5 = arith.constant 0 : i32
    %12 = tpu.memref_slice %arg10[%0, %c0_i32_4, %c0_i32_5] : memref<2x12x128xf32, #tpu.memory_space<vmem>> -> memref<1x12x128xf32, #tpu.memory_space<vmem>>
    %13 = tpu.memref_squeeze %12 : memref<1x12x128xf32, #tpu.memory_space<vmem>> -> memref<12x128xf32, #tpu.memory_space<vmem>>
    %14 = tpu.memref_slice %arg12[%0] : memref<2x!tpu.dma_semaphore, #tpu.memory_space<semaphore_mem>> -> memref<1x!tpu.dma_semaphore, #tpu.memory_space<semaphore_mem>>
    %15 = tpu.memref_squeeze %14 : memref<1x!tpu.dma_semaphore, #tpu.memory_space<semaphore_mem>> -> memref<!tpu.dma_semaphore, #tpu.memory_space<semaphore_mem>>
    tpu.wait_dma2 semaphore(%15 : memref<!tpu.dma_semaphore, #tpu.memory_space<semaphore_mem>>) src(%11 : memref<12x128xf32, #tpu.memory_space<any>>) dst(%13 : memref<12x128xf32, #tpu.memory_space<vmem>>)
    %c0_i32_6 = arith.constant 0 : i32
    %c0_i32_7 = arith.constant 0 : i32
    %16 = tpu.memref_slice %arg10[%0, %c0_i32_6, %c0_i32_7] : memref<2x12x128xf32, #tpu.memory_space<vmem>> -> memref<1x12x128xf32, #tpu.memory_space<vmem>>
    %17 = tpu.memref_squeeze %16 : memref<1x12x128xf32, #tpu.memory_space<vmem>> -> memref<12x128xf32, #tpu.memory_space<vmem>>
    %c0 = arith.constant 0 : index
    %c0_8 = arith.constant 0 : index
    %18 = vector.load %17[%c0, %c0_8] : memref<12x128xf32, #tpu.memory_space<vmem>>, vector<10x128xf32>
    %c0_9 = arith.constant 0 : index
    %c0_10 = arith.constant 0 : index
    %c0_11 = arith.constant 0 : index
    %19 = vector.load %arg3[%c0_9, %c0_10, %c0_11] : memref<3x128x256xf32, #tpu.memory_space<vmem>>, vector<1x128x256xf32>
    %20 = vector.shape_cast %19 : vector<1x128x256xf32> to vector<128x256xf32>
    %cst = arith.constant dense<0.000000e+00> : vector<10x256xf32>
    %21 = tpu.matmul %18, %20, %cst {dimension_numbers = #tpu.dot_dimension_numbers<[1], [0], [0], [1], [0, 0, 1, 1], [], []>} : vector<10x128xf32>, vector<128x256xf32>, vector<10x256xf32> -> vector<10x256xf32>
    %c0_i32_12 = arith.constant 0 : i32
    %c0_i32_13 = arith.constant 0 : i32
    %22 = tpu.memref_slice %arg10[%0, %c0_i32_12, %c0_i32_13] : memref<2x12x128xf32, #tpu.memory_space<vmem>> -> memref<1x12x128xf32, #tpu.memory_space<vmem>>
    %23 = tpu.memref_squeeze %22 : memref<1x12x128xf32, #tpu.memory_space<vmem>> -> memref<12x128xf32, #tpu.memory_space<vmem>>
    %c1 = arith.constant 1 : index
    %c0_14 = arith.constant 0 : index
    %24 = vector.load %23[%c1, %c0_14] : memref<12x128xf32, #tpu.memory_space<vmem>>, vector<10x128xf32>
    %c1_15 = arith.constant 1 : index
    %c0_16 = arith.constant 0 : index
    %c0_17 = arith.constant 0 : index
    %25 = vector.load %arg3[%c1_15, %c0_16, %c0_17] : memref<3x128x256xf32, #tpu.memory_space<vmem>>, vector<1x128x256xf32>
    %26 = vector.shape_cast %25 : vector<1x128x256xf32> to vector<128x256xf32>
    %cst_18 = arith.constant dense<0.000000e+00> : vector<10x256xf32>
    %27 = tpu.matmul %24, %26, %cst_18 {dimension_numbers = #tpu.dot_dimension_numbers<[1], [0], [0], [1], [0, 0, 1, 1], [], []>} : vector<10x128xf32>, vector<128x256xf32>, vector<10x256xf32> -> vector<10x256xf32>
    %28 = arith.addf %21, %27 : vector<10x256xf32>
    %c0_i32_19 = arith.constant 0 : i32
    %c0_i32_20 = arith.constant 0 : i32
    %29 = tpu.memref_slice %arg10[%0, %c0_i32_19, %c0_i32_20] : memref<2x12x128xf32, #tpu.memory_space<vmem>> -> memref<1x12x128xf32, #tpu.memory_space<vmem>>
    %30 = tpu.memref_squeeze %29 : memref<1x12x128xf32, #tpu.memory_space<vmem>> -> memref<12x128xf32, #tpu.memory_space<vmem>>
    %c2 = arith.constant 2 : index
    %c0_21 = arith.constant 0 : index
    %31 = vector.load %30[%c2, %c0_21] : memref<12x128xf32, #tpu.memory_space<vmem>>, vector<10x128xf32>
    %c2_22 = arith.constant 2 : index
    %c0_23 = arith.constant 0 : index
    %c0_24 = arith.constant 0 : index
    %32 = vector.load %arg3[%c2_22, %c0_23, %c0_24] : memref<3x128x256xf32, #tpu.memory_space<vmem>>, vector<1x128x256xf32>
    %33 = vector.shape_cast %32 : vector<1x128x256xf32> to vector<128x256xf32>
    %cst_25 = arith.constant dense<0.000000e+00> : vector<10x256xf32>
    %34 = tpu.matmul %31, %33, %cst_25 {dimension_numbers = #tpu.dot_dimension_numbers<[1], [0], [0], [1], [0, 0, 1, 1], [], []>} : vector<10x128xf32>, vector<128x256xf32>, vector<10x256xf32> -> vector<10x256xf32>
    %35 = arith.addf %28, %34 : vector<10x256xf32>
    %c0_26 = arith.constant 0 : index
    %c0_27 = arith.constant 0 : index
    %36 = vector.load %arg4[%c0_26, %c0_27] : memref<3x256xf32, #tpu.memory_space<vmem>>, vector<3x256xf32>
    %37 = vector.extract_strided_slice %36 {offsets = [0, 0], sizes = [1, 256], strides = [1, 1]} : vector<3x256xf32> to vector<1x256xf32>
    %38 = vector.broadcast %37 : vector<1x256xf32> to vector<10x256xf32>
    %39 = arith.addf %35, %38 : vector<10x256xf32>
    %cst_28 = arith.constant 0.000000e+00 : f32
    %40 = vector.broadcast %cst_28 : f32 to vector<10x256xf32>
    %41 = arith.maximumf %39, %40 : vector<10x256xf32>
    %42 = vector.extract_strided_slice %36 {offsets = [1, 0], sizes = [1, 256], strides = [1, 1]} : vector<3x256xf32> to vector<1x256xf32>
    %43 = vector.broadcast %42 : vector<1x256xf32> to vector<10x256xf32>
    %44 = arith.mulf %41, %43 : vector<10x256xf32>
    %45 = vector.extract_strided_slice %36 {offsets = [2, 0], sizes = [1, 256], strides = [1, 1]} : vector<3x256xf32> to vector<1x256xf32>
    %46 = vector.broadcast %45 : vector<1x256xf32> to vector<10x256xf32>
    %47 = arith.addf %44, %46 : vector<10x256xf32>
    %c8_i32_29 = arith.constant 8 : i32
    %48 = arith.muli %arg1, %c8_i32_29 : i32
    %c1_i32_30 = arith.constant 1 : i32
    %49 = arith.addi %48, %c1_i32_30 : i32
    %c2_i32_31 = arith.constant 2 : i32
    %50 = arith.subi %49, %c2_i32_31 : i32
    %51 = tpu.iota {dimensions = array<i32: 0>} : vector<10x1xi32>
    %52 = vector.broadcast %50 : i32 to vector<10x1xi32>
    %53 = arith.addi %52, %51 : vector<10x1xi32>
    %c0_i32_32 = arith.constant 0 : i32
    %54 = vector.broadcast %c0_i32_32 : i32 to vector<10x1xi32>
    %55 = arith.cmpi sge, %53, %54 : vector<10x1xi32>
    %c16_i32 = arith.constant 16 : i32
    %56 = vector.broadcast %c16_i32 : i32 to vector<10x1xi32>
    %57 = arith.cmpi slt, %53, %56 : vector<10x1xi32>
    %58 = arith.andi %55, %57 : vector<10x1xi1>
    %cst_33 = arith.constant 0.000000e+00 : f32
    %59 = vector.shape_cast %58 : vector<10x1xi1> to vector<10x1xi1>
    %60 = vector.broadcast %59 : vector<10x1xi1> to vector<10x256xi1>
    %61 = vector.broadcast %cst_33 : f32 to vector<10x256xf32>
    %62 = arith.select %60, %47, %61 : vector<10x256xi1>, vector<10x256xf32>
    %c0_34 = arith.constant 0 : index
    %c0_35 = arith.constant 0 : index
    %63 = vector.load %arg11[%c0_34, %c0_35] : memref<10x256xf32, #tpu.memory_space<vmem>>, vector<10x256xf32>
    tpu.vector_store %arg11[%c0_34, %c0_35], %62 {strides = array<i32>} : memref<10x256xf32, #tpu.memory_space<vmem>>, vector<10x256xf32>,
    %c0_36 = arith.constant 0 : index
    %c0_37 = arith.constant 0 : index
    %64 = vector.load %arg11[%c0_36, %c0_37] : memref<10x256xf32, #tpu.memory_space<vmem>>, vector<8x256xf32>
    %c0_38 = arith.constant 0 : index
    %c0_39 = arith.constant 0 : index
    %c0_40 = arith.constant 0 : index
    %65 = vector.load %arg5[%c0_38, %c0_39, %c0_40] : memref<3x256x128xf32, #tpu.memory_space<vmem>>, vector<1x256x128xf32>
    %66 = vector.shape_cast %65 : vector<1x256x128xf32> to vector<256x128xf32>
    %cst_41 = arith.constant dense<0.000000e+00> : vector<8x128xf32>
    %67 = tpu.matmul %64, %66, %cst_41 {dimension_numbers = #tpu.dot_dimension_numbers<[1], [0], [0], [1], [0, 0, 1, 1], [], []>} : vector<8x256xf32>, vector<256x128xf32>, vector<8x128xf32> -> vector<8x128xf32>
    %c1_42 = arith.constant 1 : index
    %c0_43 = arith.constant 0 : index
    %68 = vector.load %arg11[%c1_42, %c0_43] : memref<10x256xf32, #tpu.memory_space<vmem>>, vector<8x256xf32>
    %c1_44 = arith.constant 1 : index
    %c0_45 = arith.constant 0 : index
    %c0_46 = arith.constant 0 : index
    %69 = vector.load %arg5[%c1_44, %c0_45, %c0_46] : memref<3x256x128xf32, #tpu.memory_space<vmem>>, vector<1x256x128xf32>
    %70 = vector.shape_cast %69 : vector<1x256x128xf32> to vector<256x128xf32>
    %cst_47 = arith.constant dense<0.000000e+00> : vector<8x128xf32>
    %71 = tpu.matmul %68, %70, %cst_47 {dimension_numbers = #tpu.dot_dimension_numbers<[1], [0], [0], [1], [0, 0, 1, 1], [], []>} : vector<8x256xf32>, vector<256x128xf32>, vector<8x128xf32> -> vector<8x128xf32>
    %72 = arith.addf %67, %71 : vector<8x128xf32>
    %c2_48 = arith.constant 2 : index
    %c0_49 = arith.constant 0 : index
    %73 = vector.load %arg11[%c2_48, %c0_49] : memref<10x256xf32, #tpu.memory_space<vmem>>, vector<8x256xf32>
    %c2_50 = arith.constant 2 : index
    %c0_51 = arith.constant 0 : index
    %c0_52 = arith.constant 0 : index
    %74 = vector.load %arg5[%c2_50, %c0_51, %c0_52] : memref<3x256x128xf32, #tpu.memory_space<vmem>>, vector<1x256x128xf32>
    %75 = vector.shape_cast %74 : vector<1x256x128xf32> to vector<256x128xf32>
    %cst_53 = arith.constant dense<0.000000e+00> : vector<8x128xf32>
    %76 = tpu.matmul %73, %75, %cst_53 {dimension_numbers = #tpu.dot_dimension_numbers<[1], [0], [0], [1], [0, 0, 1, 1], [], []>} : vector<8x256xf32>, vector<256x128xf32>, vector<8x128xf32> -> vector<8x128xf32>
    %77 = arith.addf %72, %76 : vector<8x128xf32>
    %c0_54 = arith.constant 0 : index
    %c0_55 = arith.constant 0 : index
    %78 = vector.load %arg6[%c0_54, %c0_55] : memref<3x128xf32, #tpu.memory_space<vmem>>, vector<3x128xf32>
    %79 = vector.extract_strided_slice %78 {offsets = [0, 0], sizes = [1, 128], strides = [1, 1]} : vector<3x128xf32> to vector<1x128xf32>
    %80 = vector.broadcast %79 : vector<1x128xf32> to vector<8x128xf32>
    %81 = arith.addf %77, %80 : vector<8x128xf32>
    %cst_56 = arith.constant 0.000000e+00 : f32
    %82 = vector.broadcast %cst_56 : f32 to vector<8x128xf32>
    %83 = arith.maximumf %81, %82 : vector<8x128xf32>
    %c0_57 = arith.constant 0 : index
    %c0_58 = arith.constant 0 : index
    %84 = vector.load %arg7[%c0_57, %c0_58] : memref<128x128xf32, #tpu.memory_space<vmem>>, vector<128x128xf32>
    %cst_59 = arith.constant dense<0.000000e+00> : vector<8x128xf32>
    %85 = tpu.matmul %83, %84, %cst_59 {dimension_numbers = #tpu.dot_dimension_numbers<[1], [0], [0], [1], [0, 0, 1, 1], [], []>} : vector<8x128xf32>, vector<128x128xf32>, vector<8x128xf32> -> vector<8x128xf32>
    %c0_60 = arith.constant 0 : index
    %c0_61 = arith.constant 0 : index
    %86 = vector.load %arg8[%c0_60, %c0_61] : memref<1x128xf32, #tpu.memory_space<vmem>>, vector<1x128xf32>
    %87 = vector.broadcast %86 : vector<1x128xf32> to vector<8x128xf32>
    %88 = arith.addf %85, %87 : vector<8x128xf32>
    %c0_62 = arith.constant 0 : index
    %c0_63 = arith.constant 0 : index
    %c0_64 = arith.constant 0 : index
    %89 = vector.load %arg9[%c0_62, %c0_63, %c0_64] : memref<1x8x128xf32, #tpu.memory_space<vmem>>, vector<1x8x128xf32>
    %90 = vector.shape_cast %89 : vector<1x8x128xf32> to vector<8x128xf32>
    %91 = vector.shape_cast %88 : vector<8x128xf32> to vector<1x8x128xf32>
    tpu.vector_store %arg9[%c0_62, %c0_63, %c0_64], %91 {strides = array<i32>} : memref<1x8x128xf32, #tpu.memory_space<vmem>>, vector<1x8x128xf32>,
    return
  }
  func.func @transform_1(%arg0: i32, %arg1: i32) -> (i32, i32, i32) {
    %c0_i32 = arith.constant 0 : i32
    %c0_i32_0 = arith.constant 0 : i32
    %c0_i32_1 = arith.constant 0 : i32
    %c0_i32_2 = arith.constant 0 : i32
    return %c0_i32, %c0_i32_0, %c0_i32_1 : i32, i32, i32
  }
  func.func @transform_2(%arg0: i32, %arg1: i32) -> (i32, i32) {
    %c0_i32 = arith.constant 0 : i32
    %c0_i32_0 = arith.constant 0 : i32
    %c0_i32_1 = arith.constant 0 : i32
    return %c0_i32, %c0_i32_0 : i32, i32
  }
  func.func @transform_3(%arg0: i32, %arg1: i32) -> (i32, i32, i32) {
    %c0_i32 = arith.constant 0 : i32
    %c0_i32_0 = arith.constant 0 : i32
    %c0_i32_1 = arith.constant 0 : i32
    %c0_i32_2 = arith.constant 0 : i32
    return %c0_i32, %c0_i32_0, %c0_i32_1 : i32, i32, i32
  }
  func.func @transform_4(%arg0: i32, %arg1: i32) -> (i32, i32) {
    %c0_i32 = arith.constant 0 : i32
    %c0_i32_0 = arith.constant 0 : i32
    %c0_i32_1 = arith.constant 0 : i32
    return %c0_i32, %c0_i32_0 : i32, i32
  }
  func.func @transform_5(%arg0: i32, %arg1: i32) -> (i32, i32) {
    %c0_i32 = arith.constant 0 : i32
    %c0_i32_0 = arith.constant 0 : i32
    %c0_i32_1 = arith.constant 0 : i32
    return %c0_i32, %c0_i32_0 : i32, i32
  }
  func.func @transform_6(%arg0: i32, %arg1: i32) -> (i32, i32) {
    %c0_i32 = arith.constant 0 : i32
    %c0_i32_0 = arith.constant 0 : i32
    %c0_i32_1 = arith.constant 0 : i32
    return %c0_i32, %c0_i32_0 : i32, i32
  }
  func.func @transform_7(%arg0: i32, %arg1: i32) -> (i32, i32, i32) {
    %c0_i32 = arith.constant 0 : i32
    %c0_i32_0 = arith.constant 0 : i32
    return %arg0, %arg1, %c0_i32 : i32, i32, i32
  }
}

</mosaic_0001>

<llo_original>
// kernel: tpu_custom_call.1
$region0: #{tpu_custom_call.1}
  #allocation0 [shape = 'u32[]', space=smem, size = 0x4, offset = 0x4, fixed_abs, tag = 'smem constant byte address 0x4 - core index']
  #allocation1 [shape = 'u32[144,128]{1,0:T(1,128)}', space=vmem, size = 0x12000, scoped, tag = 'internal scratch']
  #allocation2 [shape = 'f32[2,12,128]{2,1,0:T(8,128)}', space=vmem, size = 0x4000, scoped, tag = 'scratch operand']
  #allocation3 [shape = 'f32[10,256]{1,0:T(8,128)}', space=vmem, size = 0x4000, scoped, tag = 'scratch operand']
  #allocation4 [shape = 's32[2]{0}', space=sflag, size = 0x8, scoped, tag = 'scratch operand']
  #allocation12 [shape = 's32[]', space=sflag, size = 0x4, offset = 0, fixed_abs, tag = 'sflag constant byte address 0x0 - dummy sync flag']
  #allocation13 [shape = 's32[]', space=sflag, size = 0x4, offset = 0, fixed_abs, tag = 'sflag constant byte address 0x0 - dummy sync flag']
  %s0 = inlined_call_operand.vmem [shape: f32[2,20,128], index: 0, kind: input, shape index: {}]
  %s1 = inlined_call_operand.hbm [shape: f32[3,128,256], index: 1, kind: input, shape index: {}]
  %s2 = inlined_call_operand.vmem [shape: f32[3,256], index: 2, kind: input, shape index: {}]
  %s3 = inlined_call_operand.hbm [shape: f32[3,256,128], index: 3, kind: input, shape index: {}]
  %s4 = inlined_call_operand.vmem [shape: f32[3,128], index: 4, kind: input, shape index: {}]
  %s5 = inlined_call_operand.hbm [shape: f32[128,128], index: 5, kind: input, shape index: {}]
  %s6 = inlined_call_operand.vmem [shape: f32[1,128], index: 6, kind: input, shape index: {}]
  %s7 = inlined_call_operand.hbm [shape: f32[2,16,128], index: 7, kind: output, shape index: {}]
  %s8 = sld [smem:[#allocation0]]
  $region151: #{tpu_custom_call.1} parent=0
    _
  %s10 = ssub.s32 1, %s8
  %s11 = scalar_select 0, %s10, %s8
  $region1: #{tpu_custom_call.1} parent=0
    #allocation5 [shape = 'u8[393216]{0}', space=vmem, size = 0x60000, scoped, tag = 'input window, operand 1, single buffered']
    #allocation6 [shape = 's32[2]{0}', space=sflag, size = 0x8, scoped, tag = 'scoped memory for tpu_custom_call.1']
    #allocation7 [shape = 's32[2]{0}', space=sflag, size = 0x8, scoped, tag = 'scoped memory for tpu_custom_call.1']
    #allocation8 [shape = 'u8[393216]{0}', space=vmem, size = 0x60000, scoped, tag = 'input window, operand 3, single buffered']
    #allocation9 [shape = 's32[1]{0}', space=sflag, size = 0x4, scoped, tag = 'scoped memory for tpu_custom_call.1']
    #allocation10 [shape = 'u8[65536]{0}', space=vmem, size = 0x10000, scoped, tag = 'input window, operand 5, single buffered']
    #allocation11 [shape = 'u8[8192]{0}', space=vmem, size = 0x2000, scoped, tag = 'output window, operand 0']
    %12 = vsyncpa [#allocation6], 0
    %13 = vsyncpa [#allocation9], 0
    %14 = vsyncpa [#allocation7], 0
    %s15 = scalar_lea.sflag [#allocation7], 1
    %16 = vsyncpa %s15, 0
    loop: start=0, step=1, limit=6
    $region2: #{tpu_custom_call.1} parent=1 // loop_pre_header
      _
    $region3: #{tpu_custom_call.1} parent=1 // loop_header
      %s18 = sphi 0, %s22
      %p19 = scmp.ge.s32.totalorder %s18, 6
      %s25 = sphi 0, %s37
      %s26 = sphi 0, %s33
      %s27 = sphi 0, %s25
      %s28 = sphi 0, %s26
      %s29 = sphi 0, %s27
      %s30 = sphi 0, %s28
      %s38 = sphi 0, %s38
      %s40 = sphi 0, %s38
      %s41 = sphi 0, %s40
      %s55 = sphi 0, %s41
      %s59 = sphi 0, %s59
      %s61 = sphi 0, %s59
      %s62 = sphi 0, %s61
      %s76 = sphi 0, %s62
      %s80 = sphi 0, %s80
      %s82 = sphi 0, %s80
      %s83 = sphi 0, %s82
      %s97 = sphi 0, %s83
      %s101 = sphi 0, %s101
      %s103 = sphi 0, %s101
      %s104 = sphi 0, %s103
      %s118 = sphi 0, %s104
      %s122 = sphi 0, %s122
      %s124 = sphi 0, %s122
      %s125 = sphi 0, %s124
      %s139 = sphi 0, %s125
      %s143 = sphi 0, %s143
      %s145 = sphi 0, %s143
      %s146 = sphi 0, %s145
      %s160 = sphi 0, %s146
      %s168 = sphi 0, %s170
      %s171 = sphi 0, %s168
      %s172 = sphi 0, %s171
      %s188 = sphi 0, %s172
    $region4: #{tpu_custom_call.1} parent=1 // loop_header_branch
      %21 = sbr.rel (%p19) target = $region8
    $region5: #{tpu_custom_call.1} parent=1 // loop_body
      %s23 = ssub.s32 %s18, 1
      %s24 = ssub.s32 %s18, 2
      %s31 = sadd.s32 1, %s26
      %p32 = scmp.ge.s32.totalorder %s31, 2
      %s33 = scalar_select %p32, 0, %s31
      %s34 = sadd.s32 1, %s25
      %s35 = scalar_select %p32, %s34, %s25
      %p36 = scmp.ge.s32.totalorder %s35, 2
      %s37 = scalar_select %p36, 0, %s35
      %s39 = sadd.s32 %s38, 1
      %p42 = scmp.eq.s32.totalorder %s18, 3
      %p43 = scmp.ne.s32.totalorder %s38, %s40
      %p44 = scmp.eq.s32.totalorder %s18, 0
      %p45 = por %p43, %p44
      %p46 = scmp.ne.s32.totalorder %s38, %s40
      %p47 = scmp.eq.s32.totalorder %s23, 3
      %p48 = por %p46, %p47
      %p49 = scmp.ne.s32.totalorder %s40, %s41
      %p50 = scmp.eq.s32.totalorder %s23, 0
      %p51 = por %p49, %p50
      %p52 = scmp.ne.s32.totalorder %s40, %s41
      %p53 = scmp.eq.s32.totalorder %s24, 3
      %p54 = por %p52, %p53
      %p56 = scmp.ne.s32.totalorder %s41, %s55
      %p57 = scmp.eq.s32.totalorder %s24, 0
      %p58 = por %p56, %p57
      %s60 = sadd.s32 %s59, 1
      %p63 = scmp.eq.s32.totalorder %s18, 3
      %p64 = scmp.ne.s32.totalorder %s59, %s61
      %p65 = scmp.eq.s32.totalorder %s18, 0
      %p66 = por %p64, %p65
      %p67 = scmp.ne.s32.totalorder %s59, %s61
      %p68 = scmp.eq.s32.totalorder %s23, 3
      %p69 = por %p67, %p68
      %p70 = scmp.ne.s32.totalorder %s61, %s62
      %p71 = scmp.eq.s32.totalorder %s23, 0
      %p72 = por %p70, %p71
      %p73 = scmp.ne.s32.totalorder %s61, %s62
      %p74 = scmp.eq.s32.totalorder %s24, 3
      %p75 = por %p73, %p74
      %p77 = scmp.ne.s32.totalorder %s62, %s76
      %p78 = scmp.eq.s32.totalorder %s24, 0
      %p79 = por %p77, %p78
      %s81 = sadd.s32 %s80, 1
      %p84 = scmp.eq.s32.totalorder %s18, 3
      %p85 = scmp.ne.s32.totalorder %s80, %s82
      %p86 = scmp.eq.s32.totalorder %s18, 0
      %p87 = por %p85, %p86
      %p88 = scmp.ne.s32.totalorder %s80, %s82
      %p89 = scmp.eq.s32.totalorder %s23, 3
      %p90 = por %p88, %p89
      %p91 = scmp.ne.s32.totalorder %s82, %s83
      %p92 = scmp.eq.s32.totalorder %s23, 0
      %p93 = por %p91, %p92
      %p94 = scmp.ne.s32.totalorder %s82, %s83
      %p95 = scmp.eq.s32.totalorder %s24, 3
      %p96 = por %p94, %p95
      %p98 = scmp.ne.s32.totalorder %s83, %s97
      %p99 = scmp.eq.s32.totalorder %s24, 0
      %p100 = por %p98, %p99
      %s102 = sadd.s32 %s101, 1
      %p105 = scmp.eq.s32.totalorder %s18, 3
      %p106 = scmp.ne.s32.totalorder %s101, %s103
      %p107 = scmp.eq.s32.totalorder %s18, 0
      %p108 = por %p106, %p107
      %p109 = scmp.ne.s32.totalorder %s101, %s103
      %p110 = scmp.eq.s32.totalorder %s23, 3
      %p111 = por %p109, %p110
      %p112 = scmp.ne.s32.totalorder %s103, %s104
      %p113 = scmp.eq.s32.totalorder %s23, 0
      %p114 = por %p112, %p113
      %p115 = scmp.ne.s32.totalorder %s103, %s104
      %p116 = scmp.eq.s32.totalorder %s24, 3
      %p117 = por %p115, %p116
      %p119 = scmp.ne.s32.totalorder %s104, %s118
      %p120 = scmp.eq.s32.totalorder %s24, 0
      %p121 = por %p119, %p120
      %s123 = sadd.s32 %s122, 1
      %p126 = scmp.eq.s32.totalorder %s18, 3
      %p127 = scmp.ne.s32.totalorder %s122, %s124
      %p128 = scmp.eq.s32.totalorder %s18, 0
      %p129 = por %p127, %p128
      %p130 = scmp.ne.s32.totalorder %s122, %s124
      %p131 = scmp.eq.s32.totalorder %s23, 3
      %p132 = por %p130, %p131
      %p133 = scmp.ne.s32.totalorder %s124, %s125
      %p134 = scmp.eq.s32.totalorder %s23, 0
      %p135 = por %p133, %p134
      %p136 = scmp.ne.s32.totalorder %s124, %s125
      %p137 = scmp.eq.s32.totalorder %s24, 3
      %p138 = por %p136, %p137
      %p140 = scmp.ne.s32.totalorder %s125, %s139
      %p141 = scmp.eq.s32.totalorder %s24, 0
      %p142 = por %p140, %p141
      %s144 = sadd.s32 %s143, 1
      %p147 = scmp.eq.s32.totalorder %s18, 3
      %p148 = scmp.ne.s32.totalorder %s143, %s145
      %p149 = scmp.eq.s32.totalorder %s18, 0
      %p150 = por %p148, %p149
      %p151 = scmp.ne.s32.totalorder %s143, %s145
      %p152 = scmp.eq.s32.totalorder %s23, 3
      %p153 = por %p151, %p152
      %p154 = scmp.ne.s32.totalorder %s145, %s146
      %p155 = scmp.eq.s32.totalorder %s23, 0
      %p156 = por %p154, %p155
      %p157 = scmp.ne.s32.totalorder %s145, %s146
      %p158 = scmp.eq.s32.totalorder %s24, 3
      %p159 = por %p157, %p158
      %p161 = scmp.ne.s32.totalorder %s146, %s160
      %p162 = scmp.eq.s32.totalorder %s24, 0
      %p163 = por %p161, %p162
      %s164 = ssub.s32 %s25, %s37
      %s165 = ssub.s32 %s26, %s33
      %s166 = sor.u32 %s164, %s165
      %p167 = scmp.eq.s32.totalorder %s166, 0
      %s169 = sadd.s32 %s168, 1
      %s170 = scalar_select %p167, %s168, %s169
      %p173 = pneg %p167
      %p174 = scmp.eq.s32.totalorder %s18, 3
      %p175 = por %p173, %p174
      %p176 = scmp.ne.s32.totalorder %s168, %s171
      %p177 = scmp.eq.s32.totalorder %s18, 0
      %p178 = por %p176, %p177
      %p179 = scmp.ne.s32.totalorder %s168, %s171
      %p180 = scmp.eq.s32.totalorder %s23, 3
      %p181 = por %p179, %p180
      %p182 = scmp.ne.s32.totalorder %s171, %s172
      %p183 = scmp.eq.s32.totalorder %s23, 0
      %p184 = por %p182, %p183
      %p185 = scmp.ne.s32.totalorder %s171, %s172
      %p186 = scmp.eq.s32.totalorder %s24, 3
      %p187 = por %p185, %p186
      %p189 = scmp.ne.s32.totalorder %s172, %s188
      %p190 = scmp.eq.s32.totalorder %s24, 0
      %p191 = por %p189, %p190
      %p192 = scmp.le.s32.totalorder 1, %s18
      %p193 = scmp.lt.s32.totalorder %s18, 5
      %p194 = pnand %p192, %p193
      %p195 = pneg %p194
      // Predicated region
      $region9: #{tpu_custom_call.1} parent=5 // pred_check
        _
      $region10: #{tpu_custom_call.1} parent=5 // pred_check_branch
        %197 = sbr.rel (%p194) target = $region12
      $region11: #{tpu_custom_call.1} parent=5 // pred_region
        %s198 = ssub.s32 %s18, 1
        // Predicated region
        $region13: #{tpu_custom_call.1} parent=11 // pred_check
          %p199 = pneg %p51
        $region14: #{tpu_custom_call.1} parent=11 // pred_check_branch
          %201 = sbr.rel (%p199) target = $region16
        $region15: #{tpu_custom_call.1} parent=11 // pred_region
          %s203 = ssub.s32 12288, 12288
          %204 = vsyncadd [#allocation6], %s203
          %s205 = sshll.u32 [#allocation5], 4
          %s206 = int_to_ptr.vmem [resolvable:$true] %s205
          %211 = dma.hbm_to_vmem [thread:$0]  %s1, 12288, %s206, [#allocation6], 256, 256, 16
        $region16: #{tpu_custom_call.1} parent=11 // pred_fallthru
          _
        // Predicated region
        $region17: #{tpu_custom_call.1} parent=11 // pred_check
          %p212 = pneg %p72
        $region18: #{tpu_custom_call.1} parent=11 // pred_check_branch
          %214 = sbr.rel (%p212) target = $region20
        $region19: #{tpu_custom_call.1} parent=11 // pred_region
          _
        $region20: #{tpu_custom_call.1} parent=11 // pred_fallthru
          _
        // Predicated region
        $region21: #{tpu_custom_call.1} parent=11 // pred_check
          %p215 = pneg %p93
        $region22: #{tpu_custom_call.1} parent=11 // pred_check_branch
          %217 = sbr.rel (%p215) target = $region24
        $region23: #{tpu_custom_call.1} parent=11 // pred_region
          %s219 = ssub.s32 12288, 12288
          %220 = vsyncadd [#allocation9], %s219
          %s221 = sshll.u32 [#allocation8], 4
          %s222 = int_to_ptr.vmem [resolvable:$true] %s221
          %227 = dma.hbm_to_vmem [thread:$0]  %s3, 12288, %s222, [#allocation9], 128, 128, 8
        $region24: #{tpu_custom_call.1} parent=11 // pred_fallthru
          _
        // Predicated region
        $region25: #{tpu_custom_call.1} parent=11 // pred_check
          %p228 = pneg %p114
        $region26: #{tpu_custom_call.1} parent=11 // pred_check_branch
          %230 = sbr.rel (%p228) target = $region28
        $region27: #{tpu_custom_call.1} parent=11 // pred_region
          _
        $region28: #{tpu_custom_call.1} parent=11 // pred_fallthru
          _
        // Predicated region
        $region29: #{tpu_custom_call.1} parent=11 // pred_check
          %p231 = pneg %p135
        $region30: #{tpu_custom_call.1} parent=11 // pred_check_branch
          %233 = sbr.rel (%p231) target = $region32
        $region31: #{tpu_custom_call.1} parent=11 // pred_region
          %s235 = ssub.s32 2048, 2048
          %236 = vsyncadd [#allocation9], %s235
          %s237 = sshll.u32 [#allocation10], 4
          %s238 = int_to_ptr.vmem [resolvable:$true] %s237
          %243 = dma.hbm_to_vmem [thread:$0]  %s5, 2048, %s238, [#allocation9], 128, 128, 8
        $region32: #{tpu_custom_call.1} parent=11 // pred_fallthru
          _
        // Predicated region
        $region33: #{tpu_custom_call.1} parent=11 // pred_check
          %p244 = pneg %p156
        $region34: #{tpu_custom_call.1} parent=11 // pred_check_branch
          %246 = sbr.rel (%p244) target = $region36
        $region35: #{tpu_custom_call.1} parent=11 // pred_region
          _
        $region36: #{tpu_custom_call.1} parent=11 // pred_fallthru
          _
      $region12: #{tpu_custom_call.1} parent=5 // pred_fallthru
        _
      %p247 = scmp.lt.s32.totalorder %s18, 4
      // Predicated region
      $region37: #{tpu_custom_call.1} parent=5 // pred_check
        %p248 = pneg %p247
      $region38: #{tpu_custom_call.1} parent=5 // pred_check_branch
        %250 = sbr.rel (%p248) target = $region40
      $region39: #{tpu_custom_call.1} parent=5 // pred_region
        _
      $region40: #{tpu_custom_call.1} parent=5 // pred_fallthru
        _
      %p251 = scmp.le.s32.totalorder 1, %s18
      %p252 = scmp.lt.s32.totalorder %s18, 5
      %p253 = pnand %p251, %p252
      %p254 = pneg %p253
      // Predicated region
      $region41: #{tpu_custom_call.1} parent=5 // pred_check
        _
      $region42: #{tpu_custom_call.1} parent=5 // pred_check_branch
        %256 = sbr.rel (%p253) target = $region44
      $region43: #{tpu_custom_call.1} parent=5 // pred_region
        %s257 = ssub.s32 %s18, 1
        // Predicated region
        $region45: #{tpu_custom_call.1} parent=43 // pred_check
          %p258 = pneg %p51
        $region46: #{tpu_custom_call.1} parent=43 // pred_check_branch
          %260 = sbr.rel (%p258) target = $region48
        $region47: #{tpu_custom_call.1} parent=43 // pred_region
          %261 = dma.done [#allocation6], 12288
        $region48: #{tpu_custom_call.1} parent=43 // pred_fallthru
          _
        // Predicated region
        $region49: #{tpu_custom_call.1} parent=43 // pred_check
          %p262 = pneg %p93
        $region50: #{tpu_custom_call.1} parent=43 // pred_check_branch
          %264 = sbr.rel (%p262) target = $region52
        $region51: #{tpu_custom_call.1} parent=43 // pred_region
          %265 = dma.done [#allocation9], 12288
        $region52: #{tpu_custom_call.1} parent=43 // pred_fallthru
          _
        // Predicated region
        $region53: #{tpu_custom_call.1} parent=43 // pred_check
          %p266 = pneg %p135
        $region54: #{tpu_custom_call.1} parent=43 // pred_check_branch
          %268 = sbr.rel (%p266) target = $region56
        $region55: #{tpu_custom_call.1} parent=43 // pred_region
          %269 = dma.done [#allocation9], 2048
        $region56: #{tpu_custom_call.1} parent=43 // pred_fallthru
          _
        %p270 = pneg %p51
        %p271 = pneg %p48
        %p272 = pneg %p72
        %p273 = pneg %p69
        %p274 = pneg %p93
        %p275 = pneg %p90
        %p276 = pneg %p114
        %p277 = pneg %p111
        %p278 = pneg %p135
        %p279 = pneg %p132
        %p280 = pneg %p156
        %p281 = pneg %p153
        %p282 = pneg %p184
        %p283 = pneg %p181
        %s284 = sand.u32 %s171, 1
        %s285 = scalar_lea.sflag [#allocation7], %s284
        %s286 = sand.u32 %s171, 1
        %s287 = smul.addr %s286, 8
        %s288 = scalar_lea.vmem [#allocation11], %s287
        %s289 = sand.u32 %s28, 1
        %p290 = scmp.eq.s32.totalorder %s28, 0
        // Predicated region
        $region57: #{tpu_custom_call.1} parent=43 // pred_check
          %p291 = pneg %p290
        $region58: #{tpu_custom_call.1} parent=43 // pred_check_branch
          %293 = sbr.rel (%p291) target = $region60
        $region59: #{tpu_custom_call.1} parent=43 // pred_region
          %s294 = smul.u32 %s28, 8
          %s295 = smul.u32 %s27, 24
          %s296 = sadd.s32 %s294, %s295
          %s297 = scalar_lea.vmem %s0, %s296
          %s298 = smul.u32 %s289, 16
          %s299 = scalar_lea.vmem [#allocation2], %s298
          %s300 = scalar_lea.sflag [#allocation4], %s289
          %p302 = scmp.lt.u32.totalorder 12, 8
          %p303 = pneg %p302
          // Predicated region
          $region61: #{tpu_custom_call.1} parent=59 // pred_check
            _
          $region62: #{tpu_custom_call.1} parent=59 // pred_check_branch
            %305 = sbr.rel (%p302) target = $region64
          $region63: #{tpu_custom_call.1} parent=59 // pred_region
            %s320 = sand.u32 12, 7
            %p321 = scmp.eq.s32.totalorder %s320, 0
            %p322 = pneg %p321
            // Predicated region
            $region76: #{tpu_custom_call.1} parent=63 // pred_check
              _
            $region77: #{tpu_custom_call.1} parent=63 // pred_check_branch
              %324 = sbr.rel (%p321) target = $region79
            $region78: #{tpu_custom_call.1} parent=63 // pred_region
              %s325 = sand.u32 12, 7
              %s326 = ssub.s32 12, %s325
              %s327 = scalar_lea.vmem %s297, %s326
              %s328 = ssub.s32 12, %s325
              %s329 = scalar_lea.vmem %s299, %s328 [#allocation2]
              loop: start=0, step=1, limit=1
              $region80: #{tpu_custom_call.1} parent=78 // loop_pre_header
                _
              $region81: #{tpu_custom_call.1} parent=78 // loop_header
                %s331 = sphi 0, %s335
                %p332 = scmp.ge.s32.totalorder %s331, 1
                %s336 = sphi %s297, %s297
                %s337 = sphi %s299, %s299
              $region82: #{tpu_custom_call.1} parent=78 // loop_header_branch
                %334 = sbr.rel (%p332) target = $region86
              $region83: #{tpu_custom_call.1} parent=78 // loop_body
                %v338 = vld [vmem:[%s336] sm:$0xff]
                %339 = vst [vmem:[%s337] sm:$0xff] %v338
              $region84: #{tpu_custom_call.1} parent=78 // loop_footer
                %s335 = sadd.s32 1, %s331
              $region85: #{tpu_custom_call.1} parent=78 // loop_footer_branch
                %330 = sbr.rel target = $region81
              $region86: #{tpu_custom_call.1} parent=78 // loop_exit
                _
              %s340 = sshllo.u32 0, %s325
              loop: start=0, step=1, limit=1
              $region87: #{tpu_custom_call.1} parent=78 // loop_pre_header
                _
              $region88: #{tpu_custom_call.1} parent=78 // loop_header
                %s342 = sphi 0, %s346
                %p343 = scmp.ge.s32.totalorder %s342, 1
                %s347 = sphi %s327, %s327
                %s348 = sphi %s329, %s329
              $region89: #{tpu_custom_call.1} parent=78 // loop_header_branch
                %345 = sbr.rel (%p343) target = $region93
              $region90: #{tpu_custom_call.1} parent=78 // loop_body
                %v349 = vld [vmem:[%s347] sm:%s340]
                %350 = vst [vmem:[%s348] sm:%s340] %v349
              $region91: #{tpu_custom_call.1} parent=78 // loop_footer
                %s346 = sadd.s32 1, %s342
              $region92: #{tpu_custom_call.1} parent=78 // loop_footer_branch
                %341 = sbr.rel target = $region88
              $region93: #{tpu_custom_call.1} parent=78 // loop_exit
                _
            $region79: #{tpu_custom_call.1} parent=63 // pred_fallthru
              _
          $region64: #{tpu_custom_call.1} parent=59 // pred_fallthru
            _
          // Predicated region
          $region65: #{tpu_custom_call.1} parent=59 // pred_check
            %p306 = pneg %p302
          $region66: #{tpu_custom_call.1} parent=59 // pred_check_branch
            %308 = sbr.rel (%p306) target = $region68
          $region67: #{tpu_custom_call.1} parent=59 // pred_region
            %s309 = sshllo.u32 0, 12
            loop: start=0, step=1, limit=1
            $region69: #{tpu_custom_call.1} parent=67 // loop_pre_header
              _
            $region70: #{tpu_custom_call.1} parent=67 // loop_header
              %s311 = sphi 0, %s315
              %p312 = scmp.ge.s32.totalorder %s311, 1
              %s316 = sphi %s297, %s297
              %s317 = sphi %s299, %s299
            $region71: #{tpu_custom_call.1} parent=67 // loop_header_branch
              %314 = sbr.rel (%p312) target = $region75
            $region72: #{tpu_custom_call.1} parent=67 // loop_body
              %v318 = vld [vmem:[%s316] sm:%s309]
              %319 = vst [vmem:[%s317] sm:%s309] %v318
            $region73: #{tpu_custom_call.1} parent=67 // loop_footer
              %s315 = sadd.s32 1, %s311
            $region74: #{tpu_custom_call.1} parent=67 // loop_footer_branch
              %310 = sbr.rel target = $region70
            $region75: #{tpu_custom_call.1} parent=67 // loop_exit
              _
          $region68: #{tpu_custom_call.1} parent=59 // pred_fallthru
            _
          // Predicated region
          $region94: #{tpu_custom_call.1} parent=59 // pred_check
            _
          $region95: #{tpu_custom_call.1} parent=59 // pred_check_branch
            %353 = sbr.rel (0) target = $region97
          $region96: #{tpu_custom_call.1} parent=59 // pred_region
            %354 = vsyncadd %s300, 192
          $region97: #{tpu_custom_call.1} parent=59 // pred_fallthru
            _
        $region60: #{tpu_custom_call.1} parent=43 // pred_fallthru
          _
        %s355 = sadd.s32 %s28, 1
        %p356 = scmp.lt.s32.totalorder %s355, 2
        // Predicated region
        $region98: #{tpu_custom_call.1} parent=43 // pred_check
          %p357 = pneg %p356
        $region99: #{tpu_custom_call.1} parent=43 // pred_check_branch
          %359 = sbr.rel (%p357) target = $region101
        $region100: #{tpu_custom_call.1} parent=43 // pred_region
          %s360 = ssub.s32 1, %s289
          %s361 = smul.u32 %s355, 8
          %s362 = smul.u32 %s27, 24
          %s363 = sadd.s32 %s361, %s362
          %s364 = scalar_lea.vmem %s0, %s363
          %s365 = smul.u32 %s360, 16
          %s366 = scalar_lea.vmem [#allocation2], %s365
          %s367 = scalar_lea.sflag [#allocation4], %s360
          %p369 = scmp.lt.u32.totalorder 12, 8
          %p370 = pneg %p369
          // Predicated region
          $region102: #{tpu_custom_call.1} parent=100 // pred_check
            _
          $region103: #{tpu_custom_call.1} parent=100 // pred_check_branch
            %372 = sbr.rel (%p369) target = $region105
          $region104: #{tpu_custom_call.1} parent=100 // pred_region
            %s387 = sand.u32 12, 7
            %p388 = scmp.eq.s32.totalorder %s387, 0
            %p389 = pneg %p388
            // Predicated region
            $region117: #{tpu_custom_call.1} parent=104 // pred_check
              _
            $region118: #{tpu_custom_call.1} parent=104 // pred_check_branch
              %391 = sbr.rel (%p388) target = $region120
            $region119: #{tpu_custom_call.1} parent=104 // pred_region
              %s392 = sand.u32 12, 7
              %s393 = ssub.s32 12, %s392
              %s394 = scalar_lea.vmem %s364, %s393
              %s395 = ssub.s32 12, %s392
              %s396 = scalar_lea.vmem %s366, %s395 [#allocation2]
              loop: start=0, step=1, limit=1
              $region121: #{tpu_custom_call.1} parent=119 // loop_pre_header
                _
              $region122: #{tpu_custom_call.1} parent=119 // loop_header
                %s398 = sphi 0, %s402
                %p399 = scmp.ge.s32.totalorder %s398, 1
                %s403 = sphi %s364, %s364
                %s404 = sphi %s366, %s366
              $region123: #{tpu_custom_call.1} parent=119 // loop_header_branch
                %401 = sbr.rel (%p399) target = $region127
              $region124: #{tpu_custom_call.1} parent=119 // loop_body
                %v405 = vld [vmem:[%s403] sm:$0xff]
                %406 = vst [vmem:[%s404] sm:$0xff] %v405
              $region125: #{tpu_custom_call.1} parent=119 // loop_footer
                %s402 = sadd.s32 1, %s398
              $region126: #{tpu_custom_call.1} parent=119 // loop_footer_branch
                %397 = sbr.rel target = $region122
              $region127: #{tpu_custom_call.1} parent=119 // loop_exit
                _
              %s407 = sshllo.u32 0, %s392
              loop: start=0, step=1, limit=1
              $region128: #{tpu_custom_call.1} parent=119 // loop_pre_header
                _
              $region129: #{tpu_custom_call.1} parent=119 // loop_header
                %s409 = sphi 0, %s413
                %p410 = scmp.ge.s32.totalorder %s409, 1
                %s414 = sphi %s394, %s394
                %s415 = sphi %s396, %s396
              $region130: #{tpu_custom_call.1} parent=119 // loop_header_branch
                %412 = sbr.rel (%p410) target = $region134
              $region131: #{tpu_custom_call.1} parent=119 // loop_body
                %v416 = vld [vmem:[%s414] sm:%s407]
                %417 = vst [vmem:[%s415] sm:%s407] %v416
              $region132: #{tpu_custom_call.1} parent=119 // loop_footer
                %s413 = sadd.s32 1, %s409
              $region133: #{tpu_custom_call.1} parent=119 // loop_footer_branch
                %408 = sbr.rel target = $region129
              $region134: #{tpu_custom_call.1} parent=119 // loop_exit
                _
            $region120: #{tpu_custom_call.1} parent=104 // pred_fallthru
              _
          $region105: #{tpu_custom_call.1} parent=100 // pred_fallthru
            _
          // Predicated region
          $region106: #{tpu_custom_call.1} parent=100 // pred_check
            %p373 = pneg %p369
          $region107: #{tpu_custom_call.1} parent=100 // pred_check_branch
            %375 = sbr.rel (%p373) target = $region109
          $region108: #{tpu_custom_call.1} parent=100 // pred_region
            %s376 = sshllo.u32 0, 12
            loop: start=0, step=1, limit=1
            $region110: #{tpu_custom_call.1} parent=108 // loop_pre_header
              _
            $region111: #{tpu_custom_call.1} parent=108 // loop_header
              %s378 = sphi 0, %s382
              %p379 = scmp.ge.s32.totalorder %s378, 1
              %s383 = sphi %s364, %s364
              %s384 = sphi %s366, %s366
            $region112: #{tpu_custom_call.1} parent=108 // loop_header_branch
              %381 = sbr.rel (%p379) target = $region116
            $region113: #{tpu_custom_call.1} parent=108 // loop_body
              %v385 = vld [vmem:[%s383] sm:%s376]
              %386 = vst [vmem:[%s384] sm:%s376] %v385
            $region114: #{tpu_custom_call.1} parent=108 // loop_footer
              %s382 = sadd.s32 1, %s378
            $region115: #{tpu_custom_call.1} parent=108 // loop_footer_branch
              %377 = sbr.rel target = $region111
            $region116: #{tpu_custom_call.1} parent=108 // loop_exit
              _
          $region109: #{tpu_custom_call.1} parent=100 // pred_fallthru
            _
          // Predicated region
          $region135: #{tpu_custom_call.1} parent=100 // pred_check
            _
          $region136: #{tpu_custom_call.1} parent=100 // pred_check_branch
            %420 = sbr.rel (0) target = $region138
          $region137: #{tpu_custom_call.1} parent=100 // pred_region
            %421 = vsyncadd %s367, 192
          $region138: #{tpu_custom_call.1} parent=100 // pred_fallthru
            _
        $region101: #{tpu_custom_call.1} parent=43 // pred_fallthru
          _
        %s422 = smul.u32 %s28, 8
        %s423 = smul.u32 %s289, 16
        %s424 = scalar_lea.vmem [#allocation2], %s423
        %s425 = scalar_lea.sflag [#allocation4], %s289
        %s426 = smul.u32 12, 1
        %s427 = sshll.u32 %s426, 4
        %428 = dma.done %s425, %s427
        %v429 = vld [vmem:[%s424] sm:$0xff]
        %v430 = vld [vmem:[%s424 + $0x8] sm:$0x3]
        %v431 = vld [vmem:[#allocation5] sm:$0xff]
        %v432 = vld [vmem:[#allocation5 + $0x8] sm:$0xff]
        %v433 = vld [vmem:[#allocation5 + $0x10] sm:$0xff]
        %v434 = vld [vmem:[#allocation5 + $0x18] sm:$0xff]
        %v435 = vld [vmem:[#allocation5 + $0x20] sm:$0xff]
        %v436 = vld [vmem:[#allocation5 + $0x28] sm:$0xff]
        %v437 = vld [vmem:[#allocation5 + $0x30] sm:$0xff]
        %v438 = vld [vmem:[#allocation5 + $0x38] sm:$0xff]
        %v439 = vld [vmem:[#allocation5 + $0x40] sm:$0xff]
        %v440 = vld [vmem:[#allocation5 + $0x48] sm:$0xff]
        %v441 = vld [vmem:[#allocation5 + $0x50] sm:$0xff]
        %v442 = vld [vmem:[#allocation5 + $0x58] sm:$0xff]
        %v443 = vld [vmem:[#allocation5 + $0x60] sm:$0xff]
        %v444 = vld [vmem:[#allocation5 + $0x68] sm:$0xff]
        %v445 = vld [vmem:[#allocation5 + $0x70] sm:$0xff]
        %v446 = vld [vmem:[#allocation5 + $0x78] sm:$0xff]
        %v447 = vld [vmem:[#allocation5 + $0x80] sm:$0xff]
        %v448 = vld [vmem:[#allocation5 + $0x88] sm:$0xff]
        %v449 = vld [vmem:[#allocation5 + $0x90] sm:$0xff]
        %v450 = vld [vmem:[#allocation5 + $0x98] sm:$0xff]
        %v451 = vld [vmem:[#allocation5 + $0xa0] sm:$0xff]
        %v452 = vld [vmem:[#allocation5 + $0xa8] sm:$0xff]
        %v453 = vld [vmem:[#allocation5 + $0xb0] sm:$0xff]
        %v454 = vld [vmem:[#allocation5 + $0xb8] sm:$0xff]
        %v455 = vld [vmem:[#allocation5 + $0xc0] sm:$0xff]
        %v456 = vld [vmem:[#allocation5 + $0xc8] sm:$0xff]
        %v457 = vld [vmem:[#allocation5 + $0xd0] sm:$0xff]
        %v458 = vld [vmem:[#allocation5 + $0xd8] sm:$0xff]
        %v459 = vld [vmem:[#allocation5 + $0xe0] sm:$0xff]
        %v460 = vld [vmem:[#allocation5 + $0xe8] sm:$0xff]
        %v461 = vld [vmem:[#allocation5 + $0xf0] sm:$0xff]
        %v462 = vld [vmem:[#allocation5 + $0xf8] sm:$0xff]
        %v463 = vld [vmem:[%s424 + $0x1] sm:$0xff]
        %v464 = vld [vmem:[%s424 + $0x9] sm:$0x3]
        %s465 = scalar_lea.vmem [#allocation5], 256
        %v466 = vld [vmem:[%s465] sm:$0xff]
        %v467 = vld [vmem:[%s465 + $0x8] sm:$0xff]
        %v468 = vld [vmem:[%s465 + $0x10] sm:$0xff]
        %v469 = vld [vmem:[%s465 + $0x18] sm:$0xff]
        %v470 = vld [vmem:[%s465 + $0x20] sm:$0xff]
        %v471 = vld [vmem:[%s465 + $0x28] sm:$0xff]
        %v472 = vld [vmem:[%s465 + $0x30] sm:$0xff]
        %v473 = vld [vmem:[%s465 + $0x38] sm:$0xff]
        %v474 = vld [vmem:[%s465 + $0x40] sm:$0xff]
        %v475 = vld [vmem:[%s465 + $0x48] sm:$0xff]
        %v476 = vld [vmem:[%s465 + $0x50] sm:$0xff]
        %v477 = vld [vmem:[%s465 + $0x58] sm:$0xff]
        %v478 = vld [vmem:[%s465 + $0x60] sm:$0xff]
        %v479 = vld [vmem:[%s465 + $0x68] sm:$0xff]
        %v480 = vld [vmem:[%s465 + $0x70] sm:$0xff]
        %v481 = vld [vmem:[%s465 + $0x78] sm:$0xff]
        %v482 = vld [vmem:[%s465 + $0x80] sm:$0xff]
        %v483 = vld [vmem:[%s465 + $0x88] sm:$0xff]
        %v484 = vld [vmem:[%s465 + $0x90] sm:$0xff]
        %v485 = vld [vmem:[%s465 + $0x98] sm:$0xff]
        %v486 = vld [vmem:[%s465 + $0xa0] sm:$0xff]
        %v487 = vld [vmem:[%s465 + $0xa8] sm:$0xff]
        %v488 = vld [vmem:[%s465 + $0xb0] sm:$0xff]
        %v489 = vld [vmem:[%s465 + $0xb8] sm:$0xff]
        %v490 = vld [vmem:[%s465 + $0xc0] sm:$0xff]
        %v491 = vld [vmem:[%s465 + $0xc8] sm:$0xff]
        %v492 = vld [vmem:[%s465 + $0xd0] sm:$0xff]
        %v493 = vld [vmem:[%s465 + $0xd8] sm:$0xff]
        %v494 = vld [vmem:[%s465 + $0xe0] sm:$0xff]
        %v495 = vld [vmem:[%s465 + $0xe8] sm:$0xff]
        %v496 = vld [vmem:[%s465 + $0xf0] sm:$0xff]
        %v497 = vld [vmem:[%s465 + $0xf8] sm:$0xff]
        %498 = vmatprep.subr.mxu0 %v467
        %499 = vmatpush1.msra.mxu0 %v466
        %500 = vmatprep.subr.mxu0 %v469
        %501 = vmatpush1.msra.mxu0 %v468
        %502 = vmatprep.subr.mxu0 %v471
        %503 = vmatpush1.msra.mxu0 %v470
        %504 = vmatprep.subr.mxu0 %v473
        %505 = vmatpush1.msra.mxu0 %v472
        %506 = vmatprep.subr.mxu0 %v475
        %507 = vmatpush1.msra.mxu0 %v474
        %508 = vmatprep.subr.mxu0 %v477
        %509 = vmatpush1.msra.mxu0 %v476
        %510 = vmatprep.subr.mxu0 %v479
        %511 = vmatpush1.msra.mxu0 %v478
        %512 = vmatprep.subr.mxu0 %v481
        %513 = vmatpush1.msra.mxu0 %v480
        %514 = vmatprep.subr.mxu0 %v483
        %515 = vmatpush1.msra.mxu0 %v482
        %516 = vmatprep.subr.mxu0 %v485
        %517 = vmatpush1.msra.mxu0 %v484
        %518 = vmatprep.subr.mxu0 %v487
        %519 = vmatpush1.msra.mxu0 %v486
        %520 = vmatprep.subr.mxu0 %v489
        %521 = vmatpush1.msra.mxu0 %v488
        %522 = vmatprep.subr.mxu0 %v491
        %523 = vmatpush1.msra.mxu0 %v490
        %524 = vmatprep.subr.mxu0 %v493
        %525 = vmatpush1.msra.mxu0 %v492
        %526 = vmatprep.subr.mxu0 %v495
        %527 = vmatpush1.msra.mxu0 %v494
        %528 = vmatprep.subr.mxu0 %v497
        %529 = vmatpush1.msra.mxu0 %v496
        %530 = vmatprep.subr.mxu0 0.0
        %531 = vmatpush1.msra.mxu0 0.0
        %532 = vmatprep.subr.mxu0 0.0
        %533 = vmatpush1.msra.mxu0 0.0
        %534 = vmatprep.subr.mxu0 0.0
        %535 = vmatpush1.msra.mxu0 0.0
        %536 = vmatprep.subr.mxu0 0.0
        %537 = vmatpush1.msra.mxu0 0.0
        %538 = vmatprep.subr.mxu0 0.0
        %539 = vmatpush1.msra.mxu0 0.0
        %540 = vmatprep.subr.mxu0 0.0
        %541 = vmatpush1.msra.mxu0 0.0
        %542 = vmatprep.subr.mxu0 0.0
        %543 = vmatpush1.msra.mxu0 0.0
        %544 = vmatprep.subr.mxu0 0.0
        %545 = vmatpush1.msra.mxu0 0.0
        %546 = vmatprep.subr.mxu0 0.0
        %547 = vmatpush1.msra.mxu0 0.0
        %548 = vmatprep.subr.mxu0 0.0
        %549 = vmatpush1.msra.mxu0 0.0
        %550 = vmatprep.subr.mxu0 0.0
        %551 = vmatpush1.msra.mxu0 0.0
        %552 = vmatprep.subr.mxu0 0.0
        %553 = vmatpush1.msra.mxu0 0.0
        %554 = vmatprep.subr.mxu0 0.0
        %555 = vmatpush1.msra.mxu0 0.0
        %556 = vmatprep.subr.mxu0 0.0
        %557 = vmatpush1.msra.mxu0 0.0
        %558 = vmatprep.subr.mxu0 0.0
        %559 = vmatpush1.msra.mxu0 0.0
        %560 = vmatprep.subr.mxu0 0.0
        %561 = vmatpush1.msra.mxu0 0.0
        %562 = vmatprep.mubr.f32.mxu0 0.0
        %563 = vmatmul.mubr.f32.gmra.mrb[0].mxu0 %v463
        %v564 = vpop.f32.mrb[0].mxu0
        %v565 = vadd.f32 0.0, %v564
        %v566 = vpop.f32.mrb[0].mxu0
        %v567 = vadd.f32 0.0, %v566
        %568 = vmatprep.mubr.f32.mxu0 0.0
        %569 = vmatmul.mubr.f32.gmra.mrb[0].mxu0 %v464
        %v570 = vpop.f32.mrb[0].mxu0
        %v571 = vadd.f32 0.0, %v570
        %v572 = vpop.f32.mrb[0].mxu0
        %v573 = vadd.f32 0.0, %v572
        %574 = vdwg.mxu0
        %575 = vmatprep.subr.mxu0 %v432
        %576 = vmatpush1.msra.mxu0 %v431
        %577 = vmatprep.subr.mxu0 %v434
        %578 = vmatpush1.msra.mxu0 %v433
        %579 = vmatprep.subr.mxu0 %v436
        %580 = vmatpush1.msra.mxu0 %v435
        %581 = vmatprep.subr.mxu0 %v438
        %582 = vmatpush1.msra.mxu0 %v437
        %583 = vmatprep.subr.mxu0 %v440
        %584 = vmatpush1.msra.mxu0 %v439
        %585 = vmatprep.subr.mxu0 %v442
        %586 = vmatpush1.msra.mxu0 %v441
        %587 = vmatprep.subr.mxu0 %v444
        %588 = vmatpush1.msra.mxu0 %v443
        %589 = vmatprep.subr.mxu0 %v446
        %590 = vmatpush1.msra.mxu0 %v445
        %591 = vmatprep.subr.mxu0 %v448
        %592 = vmatpush1.msra.mxu0 %v447
        %593 = vmatprep.subr.mxu0 %v450
        %594 = vmatpush1.msra.mxu0 %v449
        %595 = vmatprep.subr.mxu0 %v452
        %596 = vmatpush1.msra.mxu0 %v451
        %597 = vmatprep.subr.mxu0 %v454
        %598 = vmatpush1.msra.mxu0 %v453
        %599 = vmatprep.subr.mxu0 %v456
        %600 = vmatpush1.msra.mxu0 %v455
        %601 = vmatprep.subr.mxu0 %v458
        %602 = vmatpush1.msra.mxu0 %v457
        %603 = vmatprep.subr.mxu0 %v460
        %604 = vmatpush1.msra.mxu0 %v459
        %605 = vmatprep.subr.mxu0 %v462
        %606 = vmatpush1.msra.mxu0 %v461
        %607 = vmatprep.subr.mxu0 0.0
        %608 = vmatpush1.msra.mxu0 0.0
        %609 = vmatprep.subr.mxu0 0.0
        %610 = vmatpush1.msra.mxu0 0.0
        %611 = vmatprep.subr.mxu0 0.0
        %612 = vmatpush1.msra.mxu0 0.0
        %613 = vmatprep.subr.mxu0 0.0
        %614 = vmatpush1.msra.mxu0 0.0
        %615 = vmatprep.subr.mxu0 0.0
        %616 = vmatpush1.msra.mxu0 0.0
        %617 = vmatprep.subr.mxu0 0.0
        %618 = vmatpush1.msra.mxu0 0.0
        %619 = vmatprep.subr.mxu0 0.0
        %620 = vmatpush1.msra.mxu0 0.0
        %621 = vmatprep.subr.mxu0 0.0
        %622 = vmatpush1.msra.mxu0 0.0
        %623 = vmatprep.subr.mxu0 0.0
        %624 = vmatpush1.msra.mxu0 0.0
        %625 = vmatprep.subr.mxu0 0.0
        %626 = vmatpush1.msra.mxu0 0.0
        %627 = vmatprep.subr.mxu0 0.0
        %628 = vmatpush1.msra.mxu0 0.0
        %629 = vmatprep.subr.mxu0 0.0
        %630 = vmatpush1.msra.mxu0 0.0
        %631 = vmatprep.subr.mxu0 0.0
        %632 = vmatpush1.msra.mxu0 0.0
        %633 = vmatprep.subr.mxu0 0.0
        %634 = vmatpush1.msra.mxu0 0.0
        %635 = vmatprep.subr.mxu0 0.0
        %636 = vmatpush1.msra.mxu0 0.0
        %637 = vmatprep.subr.mxu0 0.0
        %638 = vmatpush1.msra.mxu0 0.0
        %639 = vmatprep.mubr.f32.mxu0 0.0
        %640 = vmatmul.mubr.f32.gmra.mrb[0].mxu0 %v429
        %v641 = vpop.f32.mrb[0].mxu0
        %v642 = vadd.f32 %v565, %v641
        %v643 = vpop.f32.mrb[0].mxu0
        %v644 = vadd.f32 %v567, %v643
        %645 = vmatprep.mubr.f32.mxu0 0.0
        %646 = vmatmul.mubr.f32.gmra.mrb[0].mxu0 %v430
        %v647 = vpop.f32.mrb[0].mxu0
        %v648 = vadd.f32 %v571, %v647
        %v649 = vpop.f32.mrb[0].mxu0
        %v650 = vadd.f32 %v573, %v649
        %651 = vdwg.mxu0
        %v652 = vld [vmem:[%s424 + $0x2] sm:$0xff]
        %v653 = vld [vmem:[%s424 + $0xa] sm:$0x3]
        %s654 = scalar_lea.vmem [#allocation5], 512
        %v655 = vld [vmem:[%s654] sm:$0xff]
        %v656 = vld [vmem:[%s654 + $0x8] sm:$0xff]
        %v657 = vld [vmem:[%s654 + $0x10] sm:$0xff]
        %v658 = vld [vmem:[%s654 + $0x18] sm:$0xff]
        %v659 = vld [vmem:[%s654 + $0x20] sm:$0xff]
        %v660 = vld [vmem:[%s654 + $0x28] sm:$0xff]
        %v661 = vld [vmem:[%s654 + $0x30] sm:$0xff]
        %v662 = vld [vmem:[%s654 + $0x38] sm:$0xff]
        %v663 = vld [vmem:[%s654 + $0x40] sm:$0xff]
        %v664 = vld [vmem:[%s654 + $0x48] sm:$0xff]
        %v665 = vld [vmem:[%s654 + $0x50] sm:$0xff]
        %v666 = vld [vmem:[%s654 + $0x58] sm:$0xff]
        %v667 = vld [vmem:[%s654 + $0x60] sm:$0xff]
        %v668 = vld [vmem:[%s654 + $0x68] sm:$0xff]
        %v669 = vld [vmem:[%s654 + $0x70] sm:$0xff]
        %v670 = vld [vmem:[%s654 + $0x78] sm:$0xff]
        %v671 = vld [vmem:[%s654 + $0x80] sm:$0xff]
        %v672 = vld [vmem:[%s654 + $0x88] sm:$0xff]
        %v673 = vld [vmem:[%s654 + $0x90] sm:$0xff]
        %v674 = vld [vmem:[%s654 + $0x98] sm:$0xff]
        %v675 = vld [vmem:[%s654 + $0xa0] sm:$0xff]
        %v676 = vld [vmem:[%s654 + $0xa8] sm:$0xff]
        %v677 = vld [vmem:[%s654 + $0xb0] sm:$0xff]
        %v678 = vld [vmem:[%s654 + $0xb8] sm:$0xff]
        %v679 = vld [vmem:[%s654 + $0xc0] sm:$0xff]
        %v680 = vld [vmem:[%s654 + $0xc8] sm:$0xff]
        %v681 = vld [vmem:[%s654 + $0xd0] sm:$0xff]
        %v682 = vld [vmem:[%s654 + $0xd8] sm:$0xff]
        %v683 = vld [vmem:[%s654 + $0xe0] sm:$0xff]
        %v684 = vld [vmem:[%s654 + $0xe8] sm:$0xff]
        %v685 = vld [vmem:[%s654 + $0xf0] sm:$0xff]
        %v686 = vld [vmem:[%s654 + $0xf8] sm:$0xff]
        %687 = vmatprep.subr.mxu0 %v656
        %688 = vmatpush1.msra.mxu0 %v655
        %689 = vmatprep.subr.mxu0 %v658
        %690 = vmatpush1.msra.mxu0 %v657
        %691 = vmatprep.subr.mxu0 %v660
        %692 = vmatpush1.msra.mxu0 %v659
        %693 = vmatprep.subr.mxu0 %v662
        %694 = vmatpush1.msra.mxu0 %v661
        %695 = vmatprep.subr.mxu0 %v664
        %696 = vmatpush1.msra.mxu0 %v663
        %697 = vmatprep.subr.mxu0 %v666
        %698 = vmatpush1.msra.mxu0 %v665
        %699 = vmatprep.subr.mxu0 %v668
        %700 = vmatpush1.msra.mxu0 %v667
        %701 = vmatprep.subr.mxu0 %v670
        %702 = vmatpush1.msra.mxu0 %v669
        %703 = vmatprep.subr.mxu0 %v672
        %704 = vmatpush1.msra.mxu0 %v671
        %705 = vmatprep.subr.mxu0 %v674
        %706 = vmatpush1.msra.mxu0 %v673
        %707 = vmatprep.subr.mxu0 %v676
        %708 = vmatpush1.msra.mxu0 %v675
        %709 = vmatprep.subr.mxu0 %v678
        %710 = vmatpush1.msra.mxu0 %v677
        %711 = vmatprep.subr.mxu0 %v680
        %712 = vmatpush1.msra.mxu0 %v679
        %713 = vmatprep.subr.mxu0 %v682
        %714 = vmatpush1.msra.mxu0 %v681
        %715 = vmatprep.subr.mxu0 %v684
        %716 = vmatpush1.msra.mxu0 %v683
        %717 = vmatprep.subr.mxu0 %v686
        %718 = vmatpush1.msra.mxu0 %v685
        %719 = vmatprep.subr.mxu0 0.0
        %720 = vmatpush1.msra.mxu0 0.0
        %721 = vmatprep.subr.mxu0 0.0
        %722 = vmatpush1.msra.mxu0 0.0
        %723 = vmatprep.subr.mxu0 0.0
        %724 = vmatpush1.msra.mxu0 0.0
        %725 = vmatprep.subr.mxu0 0.0
        %726 = vmatpush1.msra.mxu0 0.0
        %727 = vmatprep.subr.mxu0 0.0
        %728 = vmatpush1.msra.mxu0 0.0
        %729 = vmatprep.subr.mxu0 0.0
        %730 = vmatpush1.msra.mxu0 0.0
        %731 = vmatprep.subr.mxu0 0.0
        %732 = vmatpush1.msra.mxu0 0.0
        %733 = vmatprep.subr.mxu0 0.0
        %734 = vmatpush1.msra.mxu0 0.0
        %735 = vmatprep.subr.mxu0 0.0
        %736 = vmatpush1.msra.mxu0 0.0
        %737 = vmatprep.subr.mxu0 0.0
        %738 = vmatpush1.msra.mxu0 0.0
        %739 = vmatprep.subr.mxu0 0.0
        %740 = vmatpush1.msra.mxu0 0.0
        %741 = vmatprep.subr.mxu0 0.0
        %742 = vmatpush1.msra.mxu0 0.0
        %743 = vmatprep.subr.mxu0 0.0
        %744 = vmatpush1.msra.mxu0 0.0
        %745 = vmatprep.subr.mxu0 0.0
        %746 = vmatpush1.msra.mxu0 0.0
        %747 = vmatprep.subr.mxu0 0.0
        %748 = vmatpush1.msra.mxu0 0.0
        %749 = vmatprep.subr.mxu0 0.0
        %750 = vmatpush1.msra.mxu0 0.0
        %751 = vmatprep.mubr.f32.mxu0 0.0
        %752 = vmatmul.mubr.f32.gmra.mrb[0].mxu0 %v652
        %v753 = vpop.f32.mrb[0].mxu0
        %v754 = vadd.f32 0.0, %v753
        %v755 = vpop.f32.mrb[0].mxu0
        %v756 = vadd.f32 0.0, %v755
        %757 = vmatprep.mubr.f32.mxu0 0.0
        %758 = vmatmul.mubr.f32.gmra.mrb[0].mxu0 %v653
        %v759 = vpop.f32.mrb[0].mxu0
        %v760 = vadd.f32 0.0, %v759
        %v761 = vpop.f32.mrb[0].mxu0
        %v762 = vadd.f32 0.0, %v761
        %763 = vdwg.mxu0
        %v764 = vadd.f32 %v642, %v754
        %v765 = vadd.f32 %v644, %v756
        %v766 = vadd.f32 %v648, %v760
        %v767 = vadd.f32 %v650, %v762
        %v768 = vld [vmem:[%s2] sm:$0x77]
        %v770 = vlaneseq
        %v771 = vshrl.u32 %v770, 7
        %v772 = vsub.s32 0, %v771
        %v773 = vrot.slane %v768, %v772
        %v774 = vlaneseq
        %v775 = vshrl.u32 %v774, 7
        %v776 = vsub.s32 4, %v775
        %v777 = vrot.slane %v768, %v776
        %v780 = vlaneseq
        %v781 = vshrl.u32 %v780, 7
        %v782 = vsub.s32 0, %v781
        %v783 = vrot.slane %v773, %v782
        %v784 = vlaneseq
        %v785 = vshrl.u32 %v784, 7
        %v786 = vsub.s32 0, %v785
        %v787 = vrot.slane %v777, %v786
        %v788 = vadd.f32 %v764, %v783
        %v789 = vadd.f32 %v765, %v787
        %v790 = vadd.f32 %v766, %v783
        %v791 = vadd.f32 %v767, %v787
        %v792 = vmax.f32 %v788, 0.0
        %v793 = vmax.f32 %v789, 0.0
        %v794 = vmax.f32 %v790, 0.0
        %v795 = vmax.f32 %v791, 0.0
        %v796 = vlaneseq
        %v797 = vshrl.u32 %v796, 7
        %v798 = vsub.s32 1, %v797
        %v799 = vrot.slane %v768, %v798
        %v800 = vlaneseq
        %v801 = vshrl.u32 %v800, 7
        %v802 = vsub.s32 5, %v801
        %v803 = vrot.slane %v768, %v802
        %v806 = vlaneseq
        %v807 = vshrl.u32 %v806, 7
        %v808 = vsub.s32 1, %v807
        %v809 = vrot.slane %v799, %v808
        %v810 = vlaneseq
        %v811 = vshrl.u32 %v810, 7
        %v812 = vsub.s32 1, %v811
        %v813 = vrot.slane %v803, %v812
        %v814 = vmul.f32 %v792, %v809
        %v815 = vmul.f32 %v793, %v813
        %v816 = vmul.f32 %v794, %v809
        %v817 = vmul.f32 %v795, %v813
        %v818 = vlaneseq
        %v819 = vshrl.u32 %v818, 7
        %v820 = vsub.s32 2, %v819
        %v821 = vrot.slane %v768, %v820
        %v822 = vlaneseq
        %v823 = vshrl.u32 %v822, 7
        %v824 = vsub.s32 6, %v823
        %v825 = vrot.slane %v768, %v824
        %v828 = vlaneseq
        %v829 = vshrl.u32 %v828, 7
        %v830 = vsub.s32 2, %v829
        %v831 = vrot.slane %v821, %v830
        %v832 = vlaneseq
        %v833 = vshrl.u32 %v832, 7
        %v834 = vsub.s32 2, %v833
        %v835 = vrot.slane %v825, %v834
        %v836 = vadd.f32 %v814, %v831
        %v837 = vadd.f32 %v815, %v835
        %v838 = vadd.f32 %v816, %v831
        %v839 = vadd.f32 %v817, %v835
        %s840 = sadd.s32 %s422, 4294967295
        %v841 = vlaneseq
        %v842 = vshrl.u32 %v841, 7
        %v843 = vadd.s32 %v842, 8
        %v844 = vstv %s840
        %v845 = vadd.s32 %v844, %v842
        %v846 = vadd.s32 %v844, %v843
        %vm847 = vcmp.ge.s32.totalorder %v845, 0
        %vm848 = vcmp.ge.s32.totalorder %v846, 0
        %vm849 = vcmp.lt.s32.totalorder %v845, 16
        %vm850 = vcmp.lt.s32.totalorder %v846, 16
        %vm851 = vmand %vm847, %vm849
        %vm852 = vmand %vm848, %vm850
        %v853 = vsel %vm851, 1, 0
        %v854 = vsel %vm852, 1, 0
        %vm855 = vcmp.eq.s32.totalorder %v853, 1
        %vm856 = vcmp.eq.s32.totalorder %v854, 1
        %v857 = vsel %vm855, %v836, 0.0
        %v858 = vsel %vm855, %v837, 0.0
        %v859 = vsel %vm856, %v838, 0.0
        %v860 = vsel %vm856, %v839, 0.0
        %861 = vst [vmem:[#allocation3] sm:$0xff] %v857
        %862 = vst [vmem:[#allocation3 + $0x8] sm:$0xff] %v858
        %863 = vst [vmem:[#allocation3 + $0x10] sm:$0x3] %v859
        %864 = vst [vmem:[#allocation3 + $0x18] sm:$0x3] %v860
        %v865 = vld [vmem:[#allocation3] sm:$0xff]
        %v866 = vld [vmem:[#allocation3 + $0x8] sm:$0xff]
        %v867 = vld [vmem:[#allocation8] sm:$0xff]
        %v868 = vld [vmem:[#allocation8 + $0x8] sm:$0xff]
        %v869 = vld [vmem:[#allocation8 + $0x10] sm:$0xff]
        %v870 = vld [vmem:[#allocation8 + $0x18] sm:$0xff]
        %v871 = vld [vmem:[#allocation8 + $0x20] sm:$0xff]
        %v872 = vld [vmem:[#allocation8 + $0x28] sm:$0xff]
        %v873 = vld [vmem:[#allocation8 + $0x30] sm:$0xff]
        %v874 = vld [vmem:[#allocation8 + $0x38] sm:$0xff]
        %v875 = vld [vmem:[#allocation8 + $0x40] sm:$0xff]
        %v876 = vld [vmem:[#allocation8 + $0x48] sm:$0xff]
        %v877 = vld [vmem:[#allocation8 + $0x50] sm:$0xff]
        %v878 = vld [vmem:[#allocation8 + $0x58] sm:$0xff]
        %v879 = vld [vmem:[#allocation8 + $0x60] sm:$0xff]
        %v880 = vld [vmem:[#allocation8 + $0x68] sm:$0xff]
        %v881 = vld [vmem:[#allocation8 + $0x70] sm:$0xff]
        %v882 = vld [vmem:[#allocation8 + $0x78] sm:$0xff]
        %v883 = vld [vmem:[#allocation8 + $0x80] sm:$0xff]
        %v884 = vld [vmem:[#allocation8 + $0x88] sm:$0xff]
        %v885 = vld [vmem:[#allocation8 + $0x90] sm:$0xff]
        %v886 = vld [vmem:[#allocation8 + $0x98] sm:$0xff]
        %v887 = vld [vmem:[#allocation8 + $0xa0] sm:$0xff]
        %v888 = vld [vmem:[#allocation8 + $0xa8] sm:$0xff]
        %v889 = vld [vmem:[#allocation8 + $0xb0] sm:$0xff]
        %v890 = vld [vmem:[#allocation8 + $0xb8] sm:$0xff]
        %v891 = vld [vmem:[#allocation8 + $0xc0] sm:$0xff]
        %v892 = vld [vmem:[#allocation8 + $0xc8] sm:$0xff]
        %v893 = vld [vmem:[#allocation8 + $0xd0] sm:$0xff]
        %v894 = vld [vmem:[#allocation8 + $0xd8] sm:$0xff]
        %v895 = vld [vmem:[#allocation8 + $0xe0] sm:$0xff]
        %v896 = vld [vmem:[#allocation8 + $0xe8] sm:$0xff]
        %v897 = vld [vmem:[#allocation8 + $0xf0] sm:$0xff]
        %v898 = vld [vmem:[#allocation8 + $0xf8] sm:$0xff]
        %v899 = vld [vmem:[#allocation3] sm:$0xfe]
        %v900 = vld [vmem:[#allocation3 + $0x8] sm:$0xfe]
        %v901 = vld [vmem:[#allocation3 + $0x10] sm:$0x1]
        %v902 = vld [vmem:[#allocation3 + $0x18] sm:$0x1]
        %s903 = scalar_lea.vmem [#allocation8], 256
        %v904 = vld [vmem:[%s903] sm:$0xff]
        %v905 = vld [vmem:[%s903 + $0x8] sm:$0xff]
        %v906 = vld [vmem:[%s903 + $0x10] sm:$0xff]
        %v907 = vld [vmem:[%s903 + $0x18] sm:$0xff]
        %v908 = vld [vmem:[%s903 + $0x20] sm:$0xff]
        %v909 = vld [vmem:[%s903 + $0x28] sm:$0xff]
        %v910 = vld [vmem:[%s903 + $0x30] sm:$0xff]
        %v911 = vld [vmem:[%s903 + $0x38] sm:$0xff]
        %v912 = vld [vmem:[%s903 + $0x40] sm:$0xff]
        %v913 = vld [vmem:[%s903 + $0x48] sm:$0xff]
        %v914 = vld [vmem:[%s903 + $0x50] sm:$0xff]
        %v915 = vld [vmem:[%s903 + $0x58] sm:$0xff]
        %v916 = vld [vmem:[%s903 + $0x60] sm:$0xff]
        %v917 = vld [vmem:[%s903 + $0x68] sm:$0xff]
        %v918 = vld [vmem:[%s903 + $0x70] sm:$0xff]
        %v919 = vld [vmem:[%s903 + $0x78] sm:$0xff]
        %v920 = vld [vmem:[%s903 + $0x80] sm:$0xff]
        %v921 = vld [vmem:[%s903 + $0x88] sm:$0xff]
        %v922 = vld [vmem:[%s903 + $0x90] sm:$0xff]
        %v923 = vld [vmem:[%s903 + $0x98] sm:$0xff]
        %v924 = vld [vmem:[%s903 + $0xa0] sm:$0xff]
        %v925 = vld [vmem:[%s903 + $0xa8] sm:$0xff]
        %v926 = vld [vmem:[%s903 + $0xb0] sm:$0xff]
        %v927 = vld [vmem:[%s903 + $0xb8] sm:$0xff]
        %v928 = vld [vmem:[%s903 + $0xc0] sm:$0xff]
        %v929 = vld [vmem:[%s903 + $0xc8] sm:$0xff]
        %v930 = vld [vmem:[%s903 + $0xd0] sm:$0xff]
        %v931 = vld [vmem:[%s903 + $0xd8] sm:$0xff]
        %v932 = vld [vmem:[%s903 + $0xe0] sm:$0xff]
        %v933 = vld [vmem:[%s903 + $0xe8] sm:$0xff]
        %v934 = vld [vmem:[%s903 + $0xf0] sm:$0xff]
        %v935 = vld [vmem:[%s903 + $0xf8] sm:$0xff]
        %vm940 = vcmask 1046528
        %v941 = vrot.slane %v899, 1
        %v942 = vrot.slane %v901, 1
        %v943 = vsel %vm940, %v941, %v942
        %v944 = vrot.slane %v900, 1
        %v945 = vrot.slane %v902, 1
        %v946 = vsel %vm940, %v944, %v945
        %949 = vmatprep.subr.mxu0 0.0
        %950 = vmatpush1.msra.mxu0 %v904
        %951 = vmatprep.subr.mxu0 0.0
        %952 = vmatpush1.msra.mxu0 %v905
        %953 = vmatprep.subr.mxu0 0.0
        %954 = vmatpush1.msra.mxu0 %v906
        %955 = vmatprep.subr.mxu0 0.0
        %956 = vmatpush1.msra.mxu0 %v907
        %957 = vmatprep.subr.mxu0 0.0
        %958 = vmatpush1.msra.mxu0 %v908
        %959 = vmatprep.subr.mxu0 0.0
        %960 = vmatpush1.msra.mxu0 %v909
        %961 = vmatprep.subr.mxu0 0.0
        %962 = vmatpush1.msra.mxu0 %v910
        %963 = vmatprep.subr.mxu0 0.0
        %964 = vmatpush1.msra.mxu0 %v911
        %965 = vmatprep.subr.mxu0 0.0
        %966 = vmatpush1.msra.mxu0 %v912
        %967 = vmatprep.subr.mxu0 0.0
        %968 = vmatpush1.msra.mxu0 %v913
        %969 = vmatprep.subr.mxu0 0.0
        %970 = vmatpush1.msra.mxu0 %v914
        %971 = vmatprep.subr.mxu0 0.0
        %972 = vmatpush1.msra.mxu0 %v915
        %973 = vmatprep.subr.mxu0 0.0
        %974 = vmatpush1.msra.mxu0 %v916
        %975 = vmatprep.subr.mxu0 0.0
        %976 = vmatpush1.msra.mxu0 %v917
        %977 = vmatprep.subr.mxu0 0.0
        %978 = vmatpush1.msra.mxu0 %v918
        %979 = vmatprep.subr.mxu0 0.0
        %980 = vmatpush1.msra.mxu0 %v919
        %981 = vmatprep.subr.mxu0 0.0
        %982 = vmatpush1.msra.mxu0 %v920
        %983 = vmatprep.subr.mxu0 0.0
        %984 = vmatpush1.msra.mxu0 %v921
        %985 = vmatprep.subr.mxu0 0.0
        %986 = vmatpush1.msra.mxu0 %v922
        %987 = vmatprep.subr.mxu0 0.0
        %988 = vmatpush1.msra.mxu0 %v923
        %989 = vmatprep.subr.mxu0 0.0
        %990 = vmatpush1.msra.mxu0 %v924
        %991 = vmatprep.subr.mxu0 0.0
        %992 = vmatpush1.msra.mxu0 %v925
        %993 = vmatprep.subr.mxu0 0.0
        %994 = vmatpush1.msra.mxu0 %v926
        %995 = vmatprep.subr.mxu0 0.0
        %996 = vmatpush1.msra.mxu0 %v927
        %997 = vmatprep.subr.mxu0 0.0
        %998 = vmatpush1.msra.mxu0 %v928
        %999 = vmatprep.subr.mxu0 0.0
        %1000 = vmatpush1.msra.mxu0 %v929
        %1001 = vmatprep.subr.mxu0 0.0
        %1002 = vmatpush1.msra.mxu0 %v930
        %1003 = vmatprep.subr.mxu0 0.0
        %1004 = vmatpush1.msra.mxu0 %v931
        %1005 = vmatprep.subr.mxu0 0.0
        %1006 = vmatpush1.msra.mxu0 %v932
        %1007 = vmatprep.subr.mxu0 0.0
        %1008 = vmatpush1.msra.mxu0 %v933
        %1009 = vmatprep.subr.mxu0 0.0
        %1010 = vmatpush1.msra.mxu0 %v934
        %1011 = vmatprep.subr.mxu0 0.0
        %1012 = vmatpush1.msra.mxu0 %v935
        %1013 = vmatprep.mubr.f32.mxu0 %v946
        %1014 = vmatmul.mubr.f32.gmra.mrb[0].mxu0 %v943
        %v1015 = vpop.f32.mrb[0].mxu0
        %v1016 = vadd.f32 0.0, %v1015
        %v1017 = vpop.f32.mrb[0].mxu0
        %1018 = vdwg.mxu0
        %1019 = vmatprep.subr.mxu0 0.0
        %1020 = vmatpush1.msra.mxu0 %v867
        %1021 = vmatprep.subr.mxu0 0.0
        %1022 = vmatpush1.msra.mxu0 %v868
        %1023 = vmatprep.subr.mxu0 0.0
        %1024 = vmatpush1.msra.mxu0 %v869
        %1025 = vmatprep.subr.mxu0 0.0
        %1026 = vmatpush1.msra.mxu0 %v870
        %1027 = vmatprep.subr.mxu0 0.0
        %1028 = vmatpush1.msra.mxu0 %v871
        %1029 = vmatprep.subr.mxu0 0.0
        %1030 = vmatpush1.msra.mxu0 %v872
        %1031 = vmatprep.subr.mxu0 0.0
        %1032 = vmatpush1.msra.mxu0 %v873
        %1033 = vmatprep.subr.mxu0 0.0
        %1034 = vmatpush1.msra.mxu0 %v874
        %1035 = vmatprep.subr.mxu0 0.0
        %1036 = vmatpush1.msra.mxu0 %v875
        %1037 = vmatprep.subr.mxu0 0.0
        %1038 = vmatpush1.msra.mxu0 %v876
        %1039 = vmatprep.subr.mxu0 0.0
        %1040 = vmatpush1.msra.mxu0 %v877
        %1041 = vmatprep.subr.mxu0 0.0
        %1042 = vmatpush1.msra.mxu0 %v878
        %1043 = vmatprep.subr.mxu0 0.0
        %1044 = vmatpush1.msra.mxu0 %v879
        %1045 = vmatprep.subr.mxu0 0.0
        %1046 = vmatpush1.msra.mxu0 %v880
        %1047 = vmatprep.subr.mxu0 0.0
        %1048 = vmatpush1.msra.mxu0 %v881
        %1049 = vmatprep.subr.mxu0 0.0
        %1050 = vmatpush1.msra.mxu0 %v882
        %1051 = vmatprep.subr.mxu0 0.0
        %1052 = vmatpush1.msra.mxu0 %v883
        %1053 = vmatprep.subr.mxu0 0.0
        %1054 = vmatpush1.msra.mxu0 %v884
        %1055 = vmatprep.subr.mxu0 0.0
        %1056 = vmatpush1.msra.mxu0 %v885
        %1057 = vmatprep.subr.mxu0 0.0
        %1058 = vmatpush1.msra.mxu0 %v886
        %1059 = vmatprep.subr.mxu0 0.0
        %1060 = vmatpush1.msra.mxu0 %v887
        %1061 = vmatprep.subr.mxu0 0.0
        %1062 = vmatpush1.msra.mxu0 %v888
        %1063 = vmatprep.subr.mxu0 0.0
        %1064 = vmatpush1.msra.mxu0 %v889
        %1065 = vmatprep.subr.mxu0 0.0
        %1066 = vmatpush1.msra.mxu0 %v890
        %1067 = vmatprep.subr.mxu0 0.0
        %1068 = vmatpush1.msra.mxu0 %v891
        %1069 = vmatprep.subr.mxu0 0.0
        %1070 = vmatpush1.msra.mxu0 %v892
        %1071 = vmatprep.subr.mxu0 0.0
        %1072 = vmatpush1.msra.mxu0 %v893
        %1073 = vmatprep.subr.mxu0 0.0
        %1074 = vmatpush1.msra.mxu0 %v894
        %1075 = vmatprep.subr.mxu0 0.0
        %1076 = vmatpush1.msra.mxu0 %v895
        %1077 = vmatprep.subr.mxu0 0.0
        %1078 = vmatpush1.msra.mxu0 %v896
        %1079 = vmatprep.subr.mxu0 0.0
        %1080 = vmatpush1.msra.mxu0 %v897
        %1081 = vmatprep.subr.mxu0 0.0
        %1082 = vmatpush1.msra.mxu0 %v898
        %1083 = vmatprep.mubr.f32.mxu0 %v866
        %1084 = vmatmul.mubr.f32.gmra.mrb[0].mxu0 %v865
        %v1085 = vpop.f32.mrb[0].mxu0
        %v1086 = vadd.f32 %v1016, %v1085
        %v1087 = vpop.f32.mrb[0].mxu0
        %1088 = vdwg.mxu0
        %v1089 = vld [vmem:[#allocation3] sm:$0xfc]
        %v1090 = vld [vmem:[#allocation3 + $0x8] sm:$0xfc]
        %v1091 = vld [vmem:[#allocation3 + $0x10] sm:$0x3]
        %v1092 = vld [vmem:[#allocation3 + $0x18] sm:$0x3]
        %s1093 = scalar_lea.vmem [#allocation8], 512
        %v1094 = vld [vmem:[%s1093] sm:$0xff]
        %v1095 = vld [vmem:[%s1093 + $0x8] sm:$0xff]
        %v1096 = vld [vmem:[%s1093 + $0x10] sm:$0xff]
        %v1097 = vld [vmem:[%s1093 + $0x18] sm:$0xff]
        %v1098 = vld [vmem:[%s1093 + $0x20] sm:$0xff]
        %v1099 = vld [vmem:[%s1093 + $0x28] sm:$0xff]
        %v1100 = vld [vmem:[%s1093 + $0x30] sm:$0xff]
        %v1101 = vld [vmem:[%s1093 + $0x38] sm:$0xff]
        %v1102 = vld [vmem:[%s1093 + $0x40] sm:$0xff]
        %v1103 = vld [vmem:[%s1093 + $0x48] sm:$0xff]
        %v1104 = vld [vmem:[%s1093 + $0x50] sm:$0xff]
        %v1105 = vld [vmem:[%s1093 + $0x58] sm:$0xff]
        %v1106 = vld [vmem:[%s1093 + $0x60] sm:$0xff]
        %v1107 = vld [vmem:[%s1093 + $0x68] sm:$0xff]
        %v1108 = vld [vmem:[%s1093 + $0x70] sm:$0xff]
        %v1109 = vld [vmem:[%s1093 + $0x78] sm:$0xff]
        %v1110 = vld [vmem:[%s1093 + $0x80] sm:$0xff]
        %v1111 = vld [vmem:[%s1093 + $0x88] sm:$0xff]
        %v1112 = vld [vmem:[%s1093 + $0x90] sm:$0xff]
        %v1113 = vld [vmem:[%s1093 + $0x98] sm:$0xff]
        %v1114 = vld [vmem:[%s1093 + $0xa0] sm:$0xff]
        %v1115 = vld [vmem:[%s1093 + $0xa8] sm:$0xff]
        %v1116 = vld [vmem:[%s1093 + $0xb0] sm:$0xff]
        %v1117 = vld [vmem:[%s1093 + $0xb8] sm:$0xff]
        %v1118 = vld [vmem:[%s1093 + $0xc0] sm:$0xff]
        %v1119 = vld [vmem:[%s1093 + $0xc8] sm:$0xff]
        %v1120 = vld [vmem:[%s1093 + $0xd0] sm:$0xff]
        %v1121 = vld [vmem:[%s1093 + $0xd8] sm:$0xff]
        %v1122 = vld [vmem:[%s1093 + $0xe0] sm:$0xff]
        %v1123 = vld [vmem:[%s1093 + $0xe8] sm:$0xff]
        %v1124 = vld [vmem:[%s1093 + $0xf0] sm:$0xff]
        %v1125 = vld [vmem:[%s1093 + $0xf8] sm:$0xff]
        %vm1130 = vcmask 1045504
        %v1131 = vrot.slane %v1089, 2
        %v1132 = vrot.slane %v1091, 2
        %v1133 = vsel %vm1130, %v1131, %v1132
        %v1134 = vrot.slane %v1090, 2
        %v1135 = vrot.slane %v1092, 2
        %v1136 = vsel %vm1130, %v1134, %v1135
        %1139 = vmatprep.subr.mxu0 0.0
        %1140 = vmatpush1.msra.mxu0 %v1094
        %1141 = vmatprep.subr.mxu0 0.0
        %1142 = vmatpush1.msra.mxu0 %v1095
        %1143 = vmatprep.subr.mxu0 0.0
        %1144 = vmatpush1.msra.mxu0 %v1096
        %1145 = vmatprep.subr.mxu0 0.0
        %1146 = vmatpush1.msra.mxu0 %v1097
        %1147 = vmatprep.subr.mxu0 0.0
        %1148 = vmatpush1.msra.mxu0 %v1098
        %1149 = vmatprep.subr.mxu0 0.0
        %1150 = vmatpush1.msra.mxu0 %v1099
        %1151 = vmatprep.subr.mxu0 0.0
        %1152 = vmatpush1.msra.mxu0 %v1100
        %1153 = vmatprep.subr.mxu0 0.0
        %1154 = vmatpush1.msra.mxu0 %v1101
        %1155 = vmatprep.subr.mxu0 0.0
        %1156 = vmatpush1.msra.mxu0 %v1102
        %1157 = vmatprep.subr.mxu0 0.0
        %1158 = vmatpush1.msra.mxu0 %v1103
        %1159 = vmatprep.subr.mxu0 0.0
        %1160 = vmatpush1.msra.mxu0 %v1104
        %1161 = vmatprep.subr.mxu0 0.0
        %1162 = vmatpush1.msra.mxu0 %v1105
        %1163 = vmatprep.subr.mxu0 0.0
        %1164 = vmatpush1.msra.mxu0 %v1106
        %1165 = vmatprep.subr.mxu0 0.0
        %1166 = vmatpush1.msra.mxu0 %v1107
        %1167 = vmatprep.subr.mxu0 0.0
        %1168 = vmatpush1.msra.mxu0 %v1108
        %1169 = vmatprep.subr.mxu0 0.0
        %1170 = vmatpush1.msra.mxu0 %v1109
        %1171 = vmatprep.subr.mxu0 0.0
        %1172 = vmatpush1.msra.mxu0 %v1110
        %1173 = vmatprep.subr.mxu0 0.0
        %1174 = vmatpush1.msra.mxu0 %v1111
        %1175 = vmatprep.subr.mxu0 0.0
        %1176 = vmatpush1.msra.mxu0 %v1112
        %1177 = vmatprep.subr.mxu0 0.0
        %1178 = vmatpush1.msra.mxu0 %v1113
        %1179 = vmatprep.subr.mxu0 0.0
        %1180 = vmatpush1.msra.mxu0 %v1114
        %1181 = vmatprep.subr.mxu0 0.0
        %1182 = vmatpush1.msra.mxu0 %v1115
        %1183 = vmatprep.subr.mxu0 0.0
        %1184 = vmatpush1.msra.mxu0 %v1116
        %1185 = vmatprep.subr.mxu0 0.0
        %1186 = vmatpush1.msra.mxu0 %v1117
        %1187 = vmatprep.subr.mxu0 0.0
        %1188 = vmatpush1.msra.mxu0 %v1118
        %1189 = vmatprep.subr.mxu0 0.0
        %1190 = vmatpush1.msra.mxu0 %v1119
        %1191 = vmatprep.subr.mxu0 0.0
        %1192 = vmatpush1.msra.mxu0 %v1120
        %1193 = vmatprep.subr.mxu0 0.0
        %1194 = vmatpush1.msra.mxu0 %v1121
        %1195 = vmatprep.subr.mxu0 0.0
        %1196 = vmatpush1.msra.mxu0 %v1122
        %1197 = vmatprep.subr.mxu0 0.0
        %1198 = vmatpush1.msra.mxu0 %v1123
        %1199 = vmatprep.subr.mxu0 0.0
        %1200 = vmatpush1.msra.mxu0 %v1124
        %1201 = vmatprep.subr.mxu0 0.0
        %1202 = vmatpush1.msra.mxu0 %v1125
        %1203 = vmatprep.mubr.f32.mxu0 %v1136
        %1204 = vmatmul.mubr.f32.gmra.mrb[0].mxu0 %v1133
        %v1205 = vpop.f32.mrb[0].mxu0
        %v1206 = vadd.f32 0.0, %v1205
        %v1207 = vpop.f32.mrb[0].mxu0
        %1208 = vdwg.mxu0
        %v1209 = vadd.f32 %v1086, %v1206
        %v1210 = vld [vmem:[%s4] sm:$0x7]
        %v1211 = vlaneseq
        %v1212 = vshrl.u32 %v1211, 7
        %v1213 = vsub.s32 0, %v1212
        %v1214 = vrot.slane %v1210, %v1213
        %v1215 = vadd.f32 %v1209, %v1214
        %v1216 = vmax.f32 %v1215, 0.0
        %v1217 = vld [vmem:[#allocation10] sm:$0xff]
        %v1218 = vld [vmem:[#allocation10 + $0x8] sm:$0xff]
        %v1219 = vld [vmem:[#allocation10 + $0x10] sm:$0xff]
        %v1220 = vld [vmem:[#allocation10 + $0x18] sm:$0xff]
        %v1221 = vld [vmem:[#allocation10 + $0x20] sm:$0xff]
        %v1222 = vld [vmem:[#allocation10 + $0x28] sm:$0xff]
        %v1223 = vld [vmem:[#allocation10 + $0x30] sm:$0xff]
        %v1224 = vld [vmem:[#allocation10 + $0x38] sm:$0xff]
        %v1225 = vld [vmem:[#allocation10 + $0x40] sm:$0xff]
        %v1226 = vld [vmem:[#allocation10 + $0x48] sm:$0xff]
        %v1227 = vld [vmem:[#allocation10 + $0x50] sm:$0xff]
        %v1228 = vld [vmem:[#allocation10 + $0x58] sm:$0xff]
        %v1229 = vld [vmem:[#allocation10 + $0x60] sm:$0xff]
        %v1230 = vld [vmem:[#allocation10 + $0x68] sm:$0xff]
        %v1231 = vld [vmem:[#allocation10 + $0x70] sm:$0xff]
        %v1232 = vld [vmem:[#allocation10 + $0x78] sm:$0xff]
        %v1233 = vld [vmem:[%s6] sm:$0x1]
        %v1235 = vlaneseq
        %v1236 = vshrl.u32 %v1235, 7
        %v1237 = vsub.s32 0, %v1236
        %v1238 = vrot.slane %v1233, %v1237
        %1240 = vmatprep.subr.mxu0 0.0
        %1241 = vmatpush1.msra.mxu0 %v1217
        %1242 = vmatprep.subr.mxu0 0.0
        %1243 = vmatpush1.msra.mxu0 %v1218
        %1244 = vmatprep.subr.mxu0 0.0
        %1245 = vmatpush1.msra.mxu0 %v1219
        %1246 = vmatprep.subr.mxu0 0.0
        %1247 = vmatpush1.msra.mxu0 %v1220
        %1248 = vmatprep.subr.mxu0 0.0
        %1249 = vmatpush1.msra.mxu0 %v1221
        %1250 = vmatprep.subr.mxu0 0.0
        %1251 = vmatpush1.msra.mxu0 %v1222
        %1252 = vmatprep.subr.mxu0 0.0
        %1253 = vmatpush1.msra.mxu0 %v1223
        %1254 = vmatprep.subr.mxu0 0.0
        %1255 = vmatpush1.msra.mxu0 %v1224
        %1256 = vmatprep.subr.mxu0 0.0
        %1257 = vmatpush1.msra.mxu0 %v1225
        %1258 = vmatprep.subr.mxu0 0.0
        %1259 = vmatpush1.msra.mxu0 %v1226
        %1260 = vmatprep.subr.mxu0 0.0
        %1261 = vmatpush1.msra.mxu0 %v1227
        %1262 = vmatprep.subr.mxu0 0.0
        %1263 = vmatpush1.msra.mxu0 %v1228
        %1264 = vmatprep.subr.mxu0 0.0
        %1265 = vmatpush1.msra.mxu0 %v1229
        %1266 = vmatprep.subr.mxu0 0.0
        %1267 = vmatpush1.msra.mxu0 %v1230
        %1268 = vmatprep.subr.mxu0 0.0
        %1269 = vmatpush1.msra.mxu0 %v1231
        %1270 = vmatprep.subr.mxu0 0.0
        %1271 = vmatpush1.msra.mxu0 %v1232
        %1272 = vmatprep.subr.mxu0 0.0
        %1273 = vmatpush1.msra.mxu0 0.0
        %1274 = vmatprep.subr.mxu0 0.0
        %1275 = vmatpush1.msra.mxu0 0.0
        %1276 = vmatprep.subr.mxu0 0.0
        %1277 = vmatpush1.msra.mxu0 0.0
        %1278 = vmatprep.subr.mxu0 0.0
        %1279 = vmatpush1.msra.mxu0 0.0
        %1280 = vmatprep.subr.mxu0 0.0
        %1281 = vmatpush1.msra.mxu0 0.0
        %1282 = vmatprep.subr.mxu0 0.0
        %1283 = vmatpush1.msra.mxu0 0.0
        %1284 = vmatprep.subr.mxu0 0.0
        %1285 = vmatpush1.msra.mxu0 0.0
        %1286 = vmatprep.subr.mxu0 0.0
        %1287 = vmatpush1.msra.mxu0 0.0
        %1288 = vmatprep.subr.mxu0 0.0
        %1289 = vmatpush1.msra.mxu0 0.0
        %1290 = vmatprep.subr.mxu0 0.0
        %1291 = vmatpush1.msra.mxu0 0.0
        %1292 = vmatprep.subr.mxu0 0.0
        %1293 = vmatpush1.msra.mxu0 0.0
        %1294 = vmatprep.subr.mxu0 0.0
        %1295 = vmatpush1.msra.mxu0 0.0
        %1296 = vmatprep.subr.mxu0 0.0
        %1297 = vmatpush1.msra.mxu0 0.0
        %1298 = vmatprep.subr.mxu0 0.0
        %1299 = vmatpush1.msra.mxu0 0.0
        %1300 = vmatprep.subr.mxu0 0.0
        %1301 = vmatpush1.msra.mxu0 0.0
        %1302 = vmatprep.subr.mxu0 0.0
        %1303 = vmatpush1.msra.mxu0 0.0
        %1304 = vmatprep.mubr.f32.mxu0 0.0
        %1305 = vmatmul.mubr.f32.gmra.mrb[0].mxu0 %v1216
        %v1306 = vpop.f32.mrb[0].mxu0
        %v1307 = vadd.f32 %v1238, %v1306
        %v1308 = vpop.f32.mrb[0].mxu0
        %1309 = vdwg.mxu0
        %1310 = vst [vmem:[%s288] sm:$0xff] %v1307
        %s1311 = sand.u32 %s171, 1
        %s1312 = scalar_lea.sflag [#allocation7], %s1311
        %s1313 = sand.u32 %s171, 1
        %s1314 = smul.addr %s1313, 8
        %s1315 = scalar_lea.vmem [#allocation11], %s1314
        // Predicated region
        $region139: #{tpu_custom_call.1} parent=43 // pred_check
          %p1316 = pneg %p181
        $region140: #{tpu_custom_call.1} parent=43 // pred_check_branch
          %1318 = sbr.rel (%p1316) target = $region142
        $region141: #{tpu_custom_call.1} parent=43 // pred_region
          %s1320 = ssub.s32 128, 128
          %1321 = vsyncadd %s1312, %s1320
          %s1322 = smul.addr %s27, 2
          %s1323 = sadd.s32 %s28, %s1322
          %s1324 = smul.addr %s1323, 128
          %s1325 = scalar_lea.hbm %s7, %s1324
          %s1327 = sshll.u32 %s1315, 4
          %s1328 = int_to_ptr.vmem [resolvable:$true] %s1327
          %1330 = dma.vmem_to_hbm [thread:$0]  %s1328, 128, %s1325, %s1312
        $region142: #{tpu_custom_call.1} parent=43 // pred_fallthru
          _
      $region44: #{tpu_custom_call.1} parent=5 // pred_fallthru
        _
      %p1331 = scmp.le.s32.totalorder 2, %s18
      // Predicated region
      $region143: #{tpu_custom_call.1} parent=5 // pred_check
        %p1332 = pneg %p1331
      $region144: #{tpu_custom_call.1} parent=5 // pred_check_branch
        %1334 = sbr.rel (%p1332) target = $region146
      $region145: #{tpu_custom_call.1} parent=5 // pred_region
        %s1335 = ssub.s32 %s18, 2
        // Predicated region
        $region147: #{tpu_custom_call.1} parent=145 // pred_check
          %p1336 = pneg %p187
        $region148: #{tpu_custom_call.1} parent=145 // pred_check_branch
          %1338 = sbr.rel (%p1336) target = $region150
        $region149: #{tpu_custom_call.1} parent=145 // pred_region
          %s1339 = sand.u32 %s172, 1
          %s1340 = scalar_lea.sflag [#allocation7], %s1339
          %s1341 = sand.u32 %s172, 1
          %s1342 = smul.addr %s1341, 8
          %s1343 = scalar_lea.vmem [#allocation11], %s1342
          %1344 = dma.done %s1340, 128
        $region150: #{tpu_custom_call.1} parent=145 // pred_fallthru
          _
      $region146: #{tpu_custom_call.1} parent=5 // pred_fallthru
        _
    $region6: #{tpu_custom_call.1} parent=1 // loop_footer
      %s22 = sadd.s32 1, %s18
    $region7: #{tpu_custom_call.1} parent=1 // loop_footer_branch
      %17 = sbr.rel target = $region3
    $region8: #{tpu_custom_call.1} parent=1 // loop_exit
      _
    %1345 = vsyncpa [#allocation6], 1
    %s1346 = scalar_lea.sflag [#allocation6], 1
    %1347 = vsyncpa %s1346, 1
    %1348 = vsyncpa [#allocation9], 1
    %1349 = vsyncpa [#allocation7], 1
    %s1350 = scalar_lea.sflag [#allocation7], 1
    %1351 = vsyncpa %s1350, 1
  %1352 = vsyncmov [#allocation4]
  %s1353 = vpop.sfrf %1352
  %p1354 = scmp.eq.s32.totalorder %s1353, 0
  %p1355 = pneg %p1354
  %1357 = shalt.err (%p1355)
  %s1358 = scalar_lea.sflag [#allocation4], 1
  %1359 = vsyncmov %s1358
  %s1360 = vpop.sfrf %1359
  %p1361 = scmp.eq.s32.totalorder %s1360, 0
  %p1362 = pneg %p1361
  %1364 = shalt.err (%p1362)

</llo_original>
